<compile_context>
chip_gen: v6e
topology: v6e:2x2x1
jax: 0.10.0
libtpu: 0.0.40
codegen_flags: <defaults>
</compile_context>

<pallas_src>
import functools
import math

import jax
import jax.numpy as jnp
from jax import lax
from jax.experimental import pallas as pl
from jax.experimental.pallas import tpu as pltpu

BN_EPS = 1e-5
LEAKY_SLOPE = 0.01
NEG_BIG = -1e30


def _leaky(z):
    return jnp.where(z > 0, z, LEAKY_SLOPE * z)


def _bn_params(stats_ref, gamma, beta, count):
    # stats_ref rows: [sum, sum-of-squares] over the n^2 valid pairs.
    mu = stats_ref[0:1, :] * (1.0 / count)
    ex2 = stats_ref[1:2, :] * (1.0 / count)
    var = jnp.maximum(ex2 - mu * mu, 0.0)      # one-pass var = E[x^2] - mu^2
    rstd = lax.rsqrt(var + BN_EPS)
    scale = gamma * rstd
    shift = beta - mu * scale
    return scale, shift


# --------------------------- kernel A: pairwise MLP --------------------------
def _pair_mlp_kernel(x_ref, mask_ref, w1a_ref, w1b_ref, w2_ref, w3_ref,
                     vecs_ref, logit_ref, stats1_ref, stats2_ref, *,
                     n_real, ti, wdtype, padded):
    """grid = (phase, i-row tile).
       phase 0: accumulate BatchNorm-2 batch stats over pair tiles.
       phase 1: emit (masked) pre-softmax logits for each pair tile.
       BN1 stats are computed in closed form at the first grid step."""
    f32 = jnp.float32
    p = pl.program_id(0)                       # phase
    t = pl.program_id(1)                       # i-row tile
    i0 = pl.multiple_of(t * ti, 8)
    cnt = f32(n_real * n_real)
    nf = f32(n_real)

    b1 = vecs_ref[0:1, :]; g1 = vecs_ref[1:2, :]; be1 = vecs_ref[2:3, :]
    b2 = vecs_ref[3:4, :]; g2 = vecs_ref[4:5, :]; be2 = vecs_ref[5:6, :]

    x_full = x_ref[...].astype(wdtype)                    # (NP, k)
    x_tile = x_ref[pl.ds(i0, ti), :].astype(wdtype)       # (TI, k)
    b_full = jnp.dot(x_full, w1b_ref[...], preferred_element_type=f32)  # (NP,H)
    a_tile = jnp.dot(x_tile, w1a_ref[...], preferred_element_type=f32)  # (TI,H)

    # ---- first grid step: closed-form BN1 stats + zero BN2 accumulators.
    # sum/sumsq over the n^2 valid pairs of h1 = a_i + b_j + b1 expand into
    # per-node sums (padded node rows of x are zero, so they contribute 0).
    @pl.when(jnp.logical_and(p == 0, t == 0))
    def _init():
        a_full = jnp.dot(x_full, w1a_ref[...], preferred_element_type=f32)
        sa = jnp.sum(a_full, axis=0, keepdims=True)
        sb = jnp.sum(b_full, axis=0, keepdims=True)
        saa = jnp.sum(a_full * a_full, axis=0, keepdims=True)
        sbb = jnp.sum(b_full * b_full, axis=0, keepdims=True)
        stats1_ref[0:1, :] = nf * sa + nf * sb + cnt * b1
        stats1_ref[1:2, :] = (nf * saa + nf * sbb + cnt * (b1 * b1)
                              + 2.0 * sa * sb
                              + 2.0 * nf * (b1 * sa) + 2.0 * nf * (b1 * sb))
        stats2_ref[...] = jnp.zeros_like(stats2_ref)

    # ---- layer 1 + BN1 + LeakyReLU + layer 2 (needed by both phases) ----
    sc1, sh1 = _bn_params(stats1_ref, g1, be1, cnt)
    bb = b_full + b1                                       # (NP, H)
    # pairwise expansion: pair row (i_local * NP + j) = a_tile[i_local] + bb[j]
    # (sublane-broadcast + concat: layout-safe, no selection matrices)
    h1 = jnp.concatenate(
        [a_tile[r:r + 1, :] + bb for r in range(ti)], axis=0)   # (TI*NP, H)
    z1 = _leaky(h1 * sc1 + sh1)
    h2 = jnp.dot(z1.astype(wdtype), w2_ref[...],
                 preferred_element_type=f32) + b2               # (TI*NP, H)

    @pl.when(p == 0)
    def _accumulate_bn2():
        if padded:
            hm = h2 * mask_ref[...]
        else:
            hm = h2
        stats2_ref[0:1, :] += jnp.sum(hm, axis=0, keepdims=True)
        stats2_ref[1:2, :] += jnp.sum(hm * h2, axis=0, keepdims=True)

    @pl.when(p == 1)
    def _emit_logits():
        sc2, sh2 = _bn_params(stats2_ref, g2, be2, cnt)
        z2 = _leaky(h2 * sc2 + sh2)
        logits = jnp.dot(z2.astype(wdtype), w3_ref[...],
                         preferred_element_type=f32)            # (TI*NP, 1)
        if padded:
            logits = jnp.where(mask_ref[...] > 0.5, logits, f32(NEG_BIG))
        logit_ref[...] = logits


# ------------------ kernel B: softmax + symmetrize + Kuramoto ----------------
def _coupling_kernel(l_ref, lt_ref, pcol_ref, nrow_ref, out_ref, *,
                     coupling_scale):
    """Lane-dense (N, N) coupling stage.  l_ref holds the logits K[i, j],
    lt_ref its transpose (built for free outside the kernel)."""
    lg = l_ref[...]                                             # (NP, NP)
    m = jnp.max(jnp.max(lg, axis=1, keepdims=True), axis=0, keepdims=True)
    e = jnp.exp(lg - m)                                         # masked -> 0
    denom = jnp.sum(jnp.sum(e, axis=1, keepdims=True), axis=0, keepdims=True)
    kscale = jnp.float32(coupling_scale) / denom                # (1, 1)
    esym = 0.5 * (e + jnp.exp(lt_ref[...] - m))                 # 0.5*(E + E^T)

    h_row = nrow_ref[0:1, :]
    omega_row = nrow_ref[1:2, :]
    phase_row = nrow_ref[2:3, :]
    pd = jnp.sin(pcol_ref[...] - phase_row)                     # sin(th_i - th_j)
    coup = kscale * jnp.sum(esym * pd, axis=0, keepdims=True)   # (1, NP), sum_i
    out_ref[...] = omega_row + coup + h_row * jnp.sin(phase_row)


# --------------------------------- wrapper -----------------------------------
def kuranet_full_forward(t, y, params, *, avg_deg=1.0, use_bf16=True,
                         target_pairs=2048):
    """Pallas implementation of KuraNet_full.forward(t, y); `t` is unused
    (autonomous system).  params = (W1, b1, g1, be1, W2, b2, g2, be2, w3).
    Use target_pairs ~= 1024 on v7x (64 MiB VMEM/TC); 2048 suits v5e/v6e.
    Wrap calls in jax.jit so the tiny padding/cast glue fuses per compile."""
    del t
    f32 = jnp.float32
    y = jnp.asarray(y, f32)
    n, kp1 = y.shape
    k = kp1 - 1

    # ---- node padding & pair-tile size (static Python ints) ----
    np8 = -(-n // 8) * 8
    ti = max(8, min(np8, (max(1, target_pairs // np8) // 8) * 8))
    np_pad = -(-np8 // ti) * ti
    nt = np_pad // ti
    padded = np_pad != n

    if padded:
        y_pad = jnp.zeros((np_pad, kp1), f32).at[:n, :].set(y)
        valid = (jnp.arange(np_pad) < n).astype(f32)
        pmask = (valid[:, None] * valid[None, :]).reshape(np_pad * np_pad, 1)
    else:
        y_pad = y
        pmask = jnp.ones((np_pad * np_pad, 1), f32)
    x_pad = y_pad[:, :k]

    # ---- pad hidden dim to a multiple of 128 (zero-padded channels are
    #      exact no-ops: gamma/beta/weights are zero there) ----
    W1, b1, g1, be1, W2, b2, g2, be2, w3 = [jnp.asarray(p, f32) for p in params]
    h0 = W1.shape[1]
    hdim = -(-h0 // 128) * 128
    pc = hdim - h0
    pad_c = lambda w: jnp.pad(w, ((0, 0), (0, pc)))
    pad_v = lambda v: jnp.pad(v, (0, pc))
    w1a = pad_c(W1[:k])
    w1b = pad_c(W1[k:])
    w2p = jnp.pad(W2, ((0, pc), (0, pc)))
    w3p = jnp.pad(w3, ((0, pc), (0, 0)))
    vecs = jnp.zeros((8, hdim), f32)
    for i, v in enumerate((b1, g1, be1, b2, g2, be2)):
        vecs = vecs.at[i, :].set(pad_v(v))
    wdtype = jnp.bfloat16 if use_bf16 else jnp.float32
    w1a, w1b, w2p, w3p = [w.astype(wdtype) for w in (w1a, w1b, w2p, w3p)]

    # ---- kernel A: pairwise coupling MLP -> pre-softmax logits ----
    wb = 2 if use_bf16 else 4
    vmem_need = (5 * ti * np_pad * hdim * 4
                 + (2 * k * hdim + hdim * hdim + hdim) * wb
                 + 8 * hdim * 4 + 2 * np_pad * k * 4
                 + 6 * ti * np_pad * 4 + 4 * hdim * 4 + (2 << 20))
    vmem_limit = int(min(64 * 1024 * 1024, max(vmem_need, 32 * 1024 * 1024)))

    full = lambda p_, t_: (0, 0)
    tiled = lambda p_, t_: (t_, 0)
    logits_flat = pl.pallas_call(
        functools.partial(_pair_mlp_kernel, n_real=n, ti=ti, wdtype=wdtype,
                          padded=padded),
        out_shape=jax.ShapeDtypeStruct((np_pad * np_pad, 1), f32),
        grid=(2, nt),
        in_specs=[
            pl.BlockSpec((np_pad, k), full),          # node features
            pl.BlockSpec((ti * np_pad, 1), tiled),    # valid-pair mask
            pl.BlockSpec((k, hdim), full),            # W1[:k]
            pl.BlockSpec((k, hdim), full),            # W1[k:]
            pl.BlockSpec((hdim, hdim), full),         # W2
            pl.BlockSpec((hdim, 1), full),            # w3
            pl.BlockSpec((8, hdim), full),            # b1,g1,be1,b2,g2,be2
        ],
        out_specs=pl.BlockSpec((ti * np_pad, 1), tiled),
        scratch_shapes=[pltpu.VMEM((2, hdim), f32),   # BN1 [sum, sumsq]
                        pltpu.VMEM((2, hdim), f32)],  # BN2 [sum, sumsq]
        compiler_params=pltpu.CompilerParams(
            dimension_semantics=("arbitrary", "arbitrary"),
            vmem_limit_bytes=vmem_limit),
    )(x_pad, pmask, w1a, w1b, w2p, w3p, vecs)

    # Free XLA-level relayout of the pair-major flat logits into (N, N).
    k_logits = logits_flat.reshape(np_pad, np_pad)
    k_logits_t = k_logits.T

    # ---- kernel B: softmax + symmetrize + Kuramoto derivative ----
    phase_col = y_pad[:, k:k + 1]                      # (NP, 1)
    nrows = jnp.zeros((8, np_pad), f32)
    nrows = nrows.at[0, :].set(y_pad[:, 0])            # h
    nrows = nrows.at[1, :].set(y_pad[:, 1])            # omega
    nrows = nrows.at[2, :].set(y_pad[:, k])            # phase
    one = lambda i: (0, 0)
    delta_row = pl.pallas_call(
        functools.partial(_coupling_kernel,
                          coupling_scale=float(avg_deg) * float(n)),
        out_shape=jax.ShapeDtypeStruct((1, np_pad), f32),
        grid=(1,),
        in_specs=[pl.BlockSpec((np_pad, np_pad), one),
                  pl.BlockSpec((np_pad, np_pad), one),
                  pl.BlockSpec((np_pad, 1), one),
                  pl.BlockSpec((8, np_pad), one)],
        out_specs=pl.BlockSpec((1, np_pad), one),
        compiler_params=pltpu.CompilerParams(
            dimension_semantics=("arbitrary",)),
    )(k_logits, k_logits_t, phase_col, nrows)

    delta = delta_row[0, :n]
    # output layout plumbing (zeros for the feature columns) stays in the
    # wrapper: [zeros_like(x), d theta] -> (n, k+1)
    return jnp.concatenate([jnp.zeros((n, k), f32), delta[:, None]], axis=-1)


# ---------------- plain-JAX reference (for correctness check) ----------------
def reference_forward(y, params, *, avg_deg=1.0):
    W1, b1, g1, be1, W2, b2, g2, be2, w3 = [jnp.asarray(p, jnp.float32)
                                            for p in params]
    n = y.shape[0]
    x = y[:, :-1]
    phase = y[:, -1]
    h = x[:, 0]
    omega = x[:, 1]

    xi = jnp.broadcast_to(x[:, None, :], (n, n, x.shape[1]))
    xj = jnp.broadcast_to(x[None, :, :], (n, n, x.shape[1]))
    pf = jnp.concatenate([xi, xj], axis=-1).reshape(n * n, -1)

    def bn(z, g, b):
        mu = z.mean(0)
        var = ((z - mu) ** 2).mean(0)
        return (z - mu) / jnp.sqrt(var + BN_EPS) * g + b

    def lrelu(z):
        return jnp.where(z > 0, z, LEAKY_SLOPE * z)

    z = lrelu(bn(pf @ W1 + b1, g1, be1))
    z = lrelu(bn(z @ W2 + b2, g2, be2))
    logits = (z @ w3)[:, 0]

    K = jax.nn.softmax(logits) * (avg_deg * n)
    K = K.reshape(n, n)
    K = 0.5 * (K + K.T)

    pd = jnp.sin(phase[:, None] - phase[None, :])
    coup = jnp.sum(K * pd, axis=0)
    delta = omega + coup + h * jnp.sin(phase)
    return jnp.concatenate([jnp.zeros_like(x), delta[:, None]], axis=-1)


# -------- deterministic parameter init (shapes from KuraNet.__init__) --------
def init_params(key, feature_dim, num_hid_units):
    ks = jax.random.split(key, 3)

    def linear(kk, fan_in, fan_out, bias=True):
        bound = 1.0 / math.sqrt(fan_in)
        kw, kb = jax.random.split(kk)
        W = jax.random.uniform(kw, (fan_in, fan_out), jnp.float32, -bound, bound)
        b = (jax.random.uniform(kb, (fan_out,), jnp.float32, -bound, bound)
             if bias else None)
        return W, b

    H = num_hid_units
    W1, b1 = linear(ks[0], 2 * feature_dim, H)
    W2, b2 = linear(ks[1], H, H)
    w3, _ = linear(ks[2], H, 1, bias=False)
    g1 = jnp.ones((H,), jnp.float32); be1 = jnp.zeros((H,), jnp.float32)
    g2 = jnp.ones((H,), jnp.float32); be2 = jnp.zeros((H,), jnp.float32)
    return (W1, b1, g1, be1, W2, b2, g2, be2, w3)


if __name__ == "__main__":
    n_units = 8          # number of graph nodes
    feature_dim = 4      # node features: [h, omega, tau, extra]
    num_hid_units = 32   # padded to 128 lanes inside the kernel
    avg_deg = 1.0

    key = jax.random.PRNGKey(0)
    kp, kh, ko, ke, kph = jax.random.split(key, 5)
    params = init_params(kp, feature_dim, num_hid_units)

    h_feat = jax.random.uniform(kh, (n_units, 1), jnp.float32, 0.0, 1.0)
    omega = jax.random.normal(ko, (n_units, 1), jnp.float32)
    tau = jnp.zeros((n_units, 1), jnp.float32)          # no delays (T_neg <= 1)
    extra = jax.random.normal(ke, (n_units, 1), jnp.float32)
    phase = jax.random.uniform(kph, (n_units, 1), jnp.float32, 0.0, 2.0 * math.pi)

    y = jnp.concatenate([h_feat, omega, tau, extra, phase], axis=-1)   # (8, 5)
    t = jnp.float32(0.0)

    ref = reference_forward(y, params, avg_deg=avg_deg)

    # strict functional check: f32 MXU operands
    fwd_f32 = jax.jit(functools.partial(kuranet_full_forward,
                                        avg_deg=avg_deg, use_bf16=False))
    out_f32 = jax.block_until_ready(fwd_f32(t, y, params))
    assert out_f32.shape == (n_units, feature_dim + 1)
    assert jnp.allclose(out_f32, ref, atol=1e-3, rtol=1e-3), (
        f"f32 mismatch: max abs err {jnp.max(jnp.abs(out_f32 - ref))}")

    # perf mode (v6e/v7x): bf16 MXU operands, f32 accumulate/VPU math.
    # Loose sanity bound only; the strict check is the f32 path above.
    fwd_bf16 = jax.jit(functools.partial(kuranet_full_forward,
                                         avg_deg=avg_deg, use_bf16=True))
    out_bf16 = jax.block_until_ready(fwd_bf16(t, y, params))
    assert jnp.allclose(out_bf16, ref, atol=0.15, rtol=0.15), (
        f"bf16 mismatch: max abs err {jnp.max(jnp.abs(out_bf16 - ref))}")

    print("KERNEL_OK")
</pallas_src>

<mosaic_0001>
module attributes {stable_mosaic.version = 11 : i64} {
  func.func @_pair_mlp_kernel(%arg0: i32, %arg1: i32, %arg2: memref<8x4xf32, #tpu.memory_space<vmem>>, %arg3: memref<64x1xf32, #tpu.memory_space<vmem>>, %arg4: memref<4x128xf32, #tpu.memory_space<vmem>>, %arg5: memref<4x128xf32, #tpu.memory_space<vmem>>, %arg6: memref<128x128xf32, #tpu.memory_space<vmem>>, %arg7: memref<128x1xf32, #tpu.memory_space<vmem>>, %arg8: memref<8x128xf32, #tpu.memory_space<vmem>>, %arg9: memref<64x1xf32, #tpu.memory_space<vmem>>, %arg10: memref<2x128xf32, #tpu.memory_space<vmem>>, %arg11: memref<2x128xf32, #tpu.memory_space<vmem>>) attributes {dimension_semantics = [#tpu.dimension_semantics<arbitrary>, #tpu.dimension_semantics<arbitrary>], iteration_bounds = array<i64: 2, 1>, scalar_prefetch = 0 : i64, scratch_operands = 2 : i64, tpu.core_type = #tpu.core_type<tc>, window_params = [{pipeline_mode = #tpu.pipeline_mode<synchronous>, transform_indices = @transform_0, window_bounds = array<i64: 8, 4>}, {transform_indices = @transform_1, window_bounds = array<i64: 64, 1>}, {pipeline_mode = #tpu.pipeline_mode<synchronous>, transform_indices = @transform_2, window_bounds = array<i64: 4, 128>}, {pipeline_mode = #tpu.pipeline_mode<synchronous>, transform_indices = @transform_3, window_bounds = array<i64: 4, 128>}, {pipeline_mode = #tpu.pipeline_mode<synchronous>, transform_indices = @transform_4, window_bounds = array<i64: 128, 128>}, {pipeline_mode = #tpu.pipeline_mode<synchronous>, transform_indices = @transform_5, window_bounds = array<i64: 128, 1>}, {pipeline_mode = #tpu.pipeline_mode<synchronous>, transform_indices = @transform_6, window_bounds = array<i64: 8, 128>}, {transform_indices = @transform_7, window_bounds = array<i64: 64, 1>}]} {
    %c8_i32 = arith.constant 8 : i32
    %0 = arith.muli %arg1, %c8_i32 : i32
    %1 = tpu.assume_multiple %0, 8 : i32
    %c0 = arith.constant 0 : index
    %c0_0 = arith.constant 0 : index
    %2 = vector.load %arg8[%c0, %c0_0] : memref<8x128xf32, #tpu.memory_space<vmem>>, vector<1x128xf32>
    %c1 = arith.constant 1 : index
    %c0_1 = arith.constant 0 : index
    %3 = vector.load %arg8[%c1, %c0_1] : memref<8x128xf32, #tpu.memory_space<vmem>>, vector<1x128xf32>
    %c2 = arith.constant 2 : index
    %c0_2 = arith.constant 0 : index
    %4 = vector.load %arg8[%c2, %c0_2] : memref<8x128xf32, #tpu.memory_space<vmem>>, vector<1x128xf32>
    %c3 = arith.constant 3 : index
    %c0_3 = arith.constant 0 : index
    %5 = vector.load %arg8[%c3, %c0_3] : memref<8x128xf32, #tpu.memory_space<vmem>>, vector<1x128xf32>
    %c4 = arith.constant 4 : index
    %c0_4 = arith.constant 0 : index
    %6 = vector.load %arg8[%c4, %c0_4] : memref<8x128xf32, #tpu.memory_space<vmem>>, vector<1x128xf32>
    %c5 = arith.constant 5 : index
    %c0_5 = arith.constant 0 : index
    %7 = vector.load %arg8[%c5, %c0_5] : memref<8x128xf32, #tpu.memory_space<vmem>>, vector<1x128xf32>
    %c0_6 = arith.constant 0 : index
    %c0_7 = arith.constant 0 : index
    %8 = vector.load %arg2[%c0_6, %c0_7] : memref<8x4xf32, #tpu.memory_space<vmem>>, vector<8x4xf32>
    %9 = arith.index_cast %1 : i32 to index
    %c0_8 = arith.constant 0 : index
    %10 = vector.load %arg2[%9, %c0_8] : memref<8x4xf32, #tpu.memory_space<vmem>>, vector<8x4xf32>
    %c0_9 = arith.constant 0 : index
    %c0_10 = arith.constant 0 : index
    %11 = vector.load %arg5[%c0_9, %c0_10] : memref<4x128xf32, #tpu.memory_space<vmem>>, vector<4x128xf32>
    %cst = arith.constant dense<0.000000e+00> : vector<8x128xf32>
    %12 = tpu.matmul %8, %11, %cst {dimension_numbers = #tpu.dot_dimension_numbers<[1], [0], [0], [1], [0, 0, 1, 1], [], []>} : vector<8x4xf32>, vector<4x128xf32>, vector<8x128xf32> -> vector<8x128xf32>
    %c0_11 = arith.constant 0 : index
    %c0_12 = arith.constant 0 : index
    %13 = vector.load %arg4[%c0_11, %c0_12] : memref<4x128xf32, #tpu.memory_space<vmem>>, vector<4x128xf32>
    %cst_13 = arith.constant dense<0.000000e+00> : vector<8x128xf32>
    %14 = tpu.matmul %10, %13, %cst_13 {dimension_numbers = #tpu.dot_dimension_numbers<[1], [0], [0], [1], [0, 0, 1, 1], [], []>} : vector<8x4xf32>, vector<4x128xf32>, vector<8x128xf32> -> vector<8x128xf32>
    %c0_i32 = arith.constant 0 : i32
    %15 = arith.cmpi eq, %arg0, %c0_i32 : i32
    %c0_i32_14 = arith.constant 0 : i32
    %16 = arith.cmpi eq, %arg1, %c0_i32_14 : i32
    %17 = arith.andi %15, %16 : i1
    %18 = arith.extui %17 : i1 to i32
    %cst_15 = arith.constant 8.000000e+00 : f32
    %cst_16 = arith.constant 6.400000e+01 : f32
    %c0_i32_17 = arith.constant 0 : i32
    %19 = arith.cmpi ne, %18, %c0_i32_17 : i32
    scf.if %19 {
      %c0_37 = arith.constant 0 : index
      %c0_38 = arith.constant 0 : index
      %84 = vector.load %arg4[%c0_37, %c0_38] : memref<4x128xf32, #tpu.memory_space<vmem>>, vector<4x128xf32>
      %cst_39 = arith.constant dense<0.000000e+00> : vector<8x128xf32>
      %85 = tpu.matmul %8, %84, %cst_39 {dimension_numbers = #tpu.dot_dimension_numbers<[1], [0], [0], [1], [0, 0, 1, 1], [], []>} : vector<8x4xf32>, vector<4x128xf32>, vector<8x128xf32> -> vector<8x128xf32>
      %cst_40 = arith.constant dense<0.000000e+00> : vector<128xf32>
      %86 = vector.multi_reduction <add>, %85, %cst_40 [0] : vector<8x128xf32> to vector<128xf32>
      %87 = vector.shape_cast %86 : vector<128xf32> to vector<1x128xf32>
      %cst_41 = arith.constant dense<0.000000e+00> : vector<128xf32>
      %88 = vector.multi_reduction <add>, %12, %cst_41 [0] : vector<8x128xf32> to vector<128xf32>
      %89 = vector.shape_cast %88 : vector<128xf32> to vector<1x128xf32>
      %90 = arith.mulf %85, %85 : vector<8x128xf32>
      %cst_42 = arith.constant dense<0.000000e+00> : vector<128xf32>
      %91 = vector.multi_reduction <add>, %90, %cst_42 [0] : vector<8x128xf32> to vector<128xf32>
      %92 = vector.shape_cast %91 : vector<128xf32> to vector<1x128xf32>
      %93 = arith.mulf %12, %12 : vector<8x128xf32>
      %cst_43 = arith.constant dense<0.000000e+00> : vector<128xf32>
      %94 = vector.multi_reduction <add>, %93, %cst_43 [0] : vector<8x128xf32> to vector<128xf32>
      %95 = vector.shape_cast %94 : vector<128xf32> to vector<1x128xf32>
      %96 = vector.broadcast %cst_15 : f32 to vector<1x128xf32>
      %97 = arith.mulf %96, %87 : vector<1x128xf32>
      %98 = vector.broadcast %cst_15 : f32 to vector<1x128xf32>
      %99 = arith.mulf %98, %89 : vector<1x128xf32>
      %100 = arith.addf %97, %99 : vector<1x128xf32>
      %101 = vector.broadcast %cst_16 : f32 to vector<1x128xf32>
      %102 = arith.mulf %101, %2 : vector<1x128xf32>
      %103 = arith.addf %100, %102 : vector<1x128xf32>
      %c0_44 = arith.constant 0 : index
      %c0_45 = arith.constant 0 : index
      %104 = vector.load %arg10[%c0_44, %c0_45] : memref<2x128xf32, #tpu.memory_space<vmem>>, vector<1x128xf32>
      tpu.vector_store %arg10[%c0_44, %c0_45], %103 {strides = array<i32>} : memref<2x128xf32, #tpu.memory_space<vmem>>, vector<1x128xf32>,
      %105 = vector.broadcast %cst_15 : f32 to vector<1x128xf32>
      %106 = arith.mulf %105, %92 : vector<1x128xf32>
      %107 = vector.broadcast %cst_15 : f32 to vector<1x128xf32>
      %108 = arith.mulf %107, %95 : vector<1x128xf32>
      %109 = arith.addf %106, %108 : vector<1x128xf32>
      %110 = arith.mulf %2, %2 : vector<1x128xf32>
      %111 = vector.broadcast %cst_16 : f32 to vector<1x128xf32>
      %112 = arith.mulf %111, %110 : vector<1x128xf32>
      %113 = arith.addf %109, %112 : vector<1x128xf32>
      %cst_46 = arith.constant 2.000000e+00 : f32
      %114 = vector.broadcast %cst_46 : f32 to vector<1x128xf32>
      %115 = arith.mulf %114, %87 : vector<1x128xf32>
      %116 = arith.mulf %115, %89 : vector<1x128xf32>
      %117 = arith.addf %113, %116 : vector<1x128xf32>
      %cst_47 = arith.constant 2.000000e+00 : f32
      %118 = arith.mulf %cst_47, %cst_15 : f32
      %119 = arith.mulf %2, %87 : vector<1x128xf32>
      %120 = vector.broadcast %118 : f32 to vector<1x128xf32>
      %121 = arith.mulf %120, %119 : vector<1x128xf32>
      %122 = arith.addf %117, %121 : vector<1x128xf32>
      %cst_48 = arith.constant 2.000000e+00 : f32
      %123 = arith.mulf %cst_48, %cst_15 : f32
      %124 = arith.mulf %2, %89 : vector<1x128xf32>
      %125 = vector.broadcast %123 : f32 to vector<1x128xf32>
      %126 = arith.mulf %125, %124 : vector<1x128xf32>
      %127 = arith.addf %122, %126 : vector<1x128xf32>
      %c1_49 = arith.constant 1 : index
      %c0_50 = arith.constant 0 : index
      %128 = vector.load %arg10[%c1_49, %c0_50] : memref<2x128xf32, #tpu.memory_space<vmem>>, vector<1x128xf32>
      tpu.vector_store %arg10[%c1_49, %c0_50], %127 {strides = array<i32>} : memref<2x128xf32, #tpu.memory_space<vmem>>, vector<1x128xf32>,
      %cst_51 = arith.constant 0.000000e+00 : f32
      %129 = vector.broadcast %cst_51 : f32 to vector<2x128xf32>
      %c0_52 = arith.constant 0 : index
      %c0_53 = arith.constant 0 : index
      %130 = vector.load %arg11[%c0_52, %c0_53] : memref<2x128xf32, #tpu.memory_space<vmem>>, vector<2x128xf32>
      tpu.vector_store %arg11[%c0_52, %c0_53], %129 {strides = array<i32>} : memref<2x128xf32, #tpu.memory_space<vmem>>, vector<2x128xf32>,
    } else {
    }
    %c0_18 = arith.constant 0 : index
    %c0_19 = arith.constant 0 : index
    %20 = vector.load %arg10[%c0_18, %c0_19] : memref<2x128xf32, #tpu.memory_space<vmem>>, vector<1x128xf32>
    %cst_20 = arith.constant 1.000000e+00 : f32
    %cst_21 = arith.constant 6.400000e+01 : f32
    %21 = arith.divf %cst_20, %cst_21 : f32
    %22 = vector.broadcast %21 : f32 to vector<1x128xf32>
    %23 = arith.mulf %20, %22 : vector<1x128xf32>
    %c1_22 = arith.constant 1 : index
    %c0_23 = arith.constant 0 : index
    %24 = vector.load %arg10[%c1_22, %c0_23] : memref<2x128xf32, #tpu.memory_space<vmem>>, vector<1x128xf32>
    %cst_24 = arith.constant 1.000000e+00 : f32
    %cst_25 = arith.constant 6.400000e+01 : f32
    %25 = arith.divf %cst_24, %cst_25 : f32
    %26 = vector.broadcast %25 : f32 to vector<1x128xf32>
    %27 = arith.mulf %24, %26 : vector<1x128xf32>
    %28 = arith.mulf %23, %23 : vector<1x128xf32>
    %29 = arith.subf %27, %28 : vector<1x128xf32>
    %cst_26 = arith.constant 0.000000e+00 : f32
    %30 = vector.broadcast %cst_26 : f32 to vector<1x128xf32>
    %31 = arith.maximumf %29, %30 : vector<1x128xf32>
    %cst_27 = arith.constant 9.99999974E-6 : f32
    %32 = vector.broadcast %cst_27 : f32 to vector<1x128xf32>
    %33 = arith.addf %31, %32 : vector<1x128xf32>
    %34 = math.rsqrt %33 : vector<1x128xf32>
    %35 = arith.mulf %3, %34 : vector<1x128xf32>
    %36 = arith.mulf %23, %35 : vector<1x128xf32>
    %37 = arith.subf %4, %36 : vector<1x128xf32>
    %38 = vector.broadcast %2 : vector<1x128xf32> to vector<8x128xf32>
    %39 = arith.addf %12, %38 : vector<8x128xf32>
    %40 = vector.extract_strided_slice %14 {offsets = [0, 0], sizes = [1, 128], strides = [1, 1]} : vector<8x128xf32> to vector<1x128xf32>
    %41 = vector.broadcast %40 : vector<1x128xf32> to vector<8x128xf32>
    %42 = arith.addf %41, %39 : vector<8x128xf32>
    %43 = vector.extract_strided_slice %14 {offsets = [1, 0], sizes = [1, 128], strides = [1, 1]} : vector<8x128xf32> to vector<1x128xf32>
    %44 = vector.broadcast %43 : vector<1x128xf32> to vector<8x128xf32>
    %45 = arith.addf %44, %39 : vector<8x128xf32>
    %46 = vector.extract_strided_slice %14 {offsets = [2, 0], sizes = [1, 128], strides = [1, 1]} : vector<8x128xf32> to vector<1x128xf32>
    %47 = vector.broadcast %46 : vector<1x128xf32> to vector<8x128xf32>
    %48 = arith.addf %47, %39 : vector<8x128xf32>
    %49 = vector.extract_strided_slice %14 {offsets = [3, 0], sizes = [1, 128], strides = [1, 1]} : vector<8x128xf32> to vector<1x128xf32>
    %50 = vector.broadcast %49 : vector<1x128xf32> to vector<8x128xf32>
    %51 = arith.addf %50, %39 : vector<8x128xf32>
    %52 = vector.extract_strided_slice %14 {offsets = [4, 0], sizes = [1, 128], strides = [1, 1]} : vector<8x128xf32> to vector<1x128xf32>
    %53 = vector.broadcast %52 : vector<1x128xf32> to vector<8x128xf32>
    %54 = arith.addf %53, %39 : vector<8x128xf32>
    %55 = vector.extract_strided_slice %14 {offsets = [5, 0], sizes = [1, 128], strides = [1, 1]} : vector<8x128xf32> to vector<1x128xf32>
    %56 = vector.broadcast %55 : vector<1x128xf32> to vector<8x128xf32>
    %57 = arith.addf %56, %39 : vector<8x128xf32>
    %58 = vector.extract_strided_slice %14 {offsets = [6, 0], sizes = [1, 128], strides = [1, 1]} : vector<8x128xf32> to vector<1x128xf32>
    %59 = vector.broadcast %58 : vector<1x128xf32> to vector<8x128xf32>
    %60 = arith.addf %59, %39 : vector<8x128xf32>
    %61 = vector.extract_strided_slice %14 {offsets = [7, 0], sizes = [1, 128], strides = [1, 1]} : vector<8x128xf32> to vector<1x128xf32>
    %62 = vector.broadcast %61 : vector<1x128xf32> to vector<8x128xf32>
    %63 = arith.addf %62, %39 : vector<8x128xf32>
    %64 = tpu.concatenate %42, %45, %48, %51, %54, %57, %60, %63 in 0 : vector<8x128xf32>, vector<8x128xf32>, vector<8x128xf32>, vector<8x128xf32>, vector<8x128xf32>, vector<8x128xf32>, vector<8x128xf32>, vector<8x128xf32> -> vector<64x128xf32>
    %65 = vector.broadcast %35 : vector<1x128xf32> to vector<64x128xf32>
    %66 = arith.mulf %64, %65 : vector<64x128xf32>
    %67 = vector.broadcast %37 : vector<1x128xf32> to vector<64x128xf32>
    %68 = arith.addf %66, %67 : vector<64x128xf32>
    %cst_28 = arith.constant 0.000000e+00 : f32
    %69 = vector.broadcast %cst_28 : f32 to vector<64x128xf32>
    %70 = arith.cmpf ogt, %68, %69 : vector<64x128xf32>
    %cst_29 = arith.constant 0.00999999977 : f32
    %71 = vector.broadcast %cst_29 : f32 to vector<64x128xf32>
    %72 = arith.mulf %71, %68 : vector<64x128xf32>
    %73 = arith.select %70, %68, %72 : vector<64x128xi1>, vector<64x128xf32>
    %c0_30 = arith.constant 0 : index
    %c0_31 = arith.constant 0 : index
    %74 = vector.load %arg6[%c0_30, %c0_31] : memref<128x128xf32, #tpu.memory_space<vmem>>, vector<128x128xf32>
    %cst_32 = arith.constant dense<0.000000e+00> : vector<64x128xf32>
    %75 = tpu.matmul %73, %74, %cst_32 {dimension_numbers = #tpu.dot_dimension_numbers<[1], [0], [0], [1], [0, 0, 1, 1], [], []>} : vector<64x128xf32>, vector<128x128xf32>, vector<64x128xf32> -> vector<64x128xf32>
    %76 = vector.broadcast %5 : vector<1x128xf32> to vector<64x128xf32>
    %77 = arith.addf %75, %76 : vector<64x128xf32>
    %c0_i32_33 = arith.constant 0 : i32
    %78 = arith.cmpi eq, %arg0, %c0_i32_33 : i32
    %79 = arith.extui %78 : i1 to i32
    %c0_i32_34 = arith.constant 0 : i32
    %80 = arith.cmpi ne, %79, %c0_i32_34 : i32
    scf.if %80 {
      %c0_37 = arith.constant 0 : index
      %c0_38 = arith.constant 0 : index
      %84 = vector.load %arg11[%c0_37, %c0_38] : memref<2x128xf32, #tpu.memory_space<vmem>>, vector<1x128xf32>
      %cst_39 = arith.constant dense<0.000000e+00> : vector<128xf32>
      %85 = vector.multi_reduction <add>, %77, %cst_39 [0] : vector<64x128xf32> to vector<128xf32>
      %86 = vector.shape_cast %85 : vector<128xf32> to vector<1x128xf32>
      %87 = arith.addf %84, %86 : vector<1x128xf32>
      %c0_40 = arith.constant 0 : index
      %c0_41 = arith.constant 0 : index
      %88 = vector.load %arg11[%c0_40, %c0_41] : memref<2x128xf32, #tpu.memory_space<vmem>>, vector<1x128xf32>
      tpu.vector_store %arg11[%c0_40, %c0_41], %87 {strides = array<i32>} : memref<2x128xf32, #tpu.memory_space<vmem>>, vector<1x128xf32>,
      %c1_42 = arith.constant 1 : index
      %c0_43 = arith.constant 0 : index
      %89 = vector.load %arg11[%c1_42, %c0_43] : memref<2x128xf32, #tpu.memory_space<vmem>>, vector<1x128xf32>
      %90 = arith.mulf %77, %77 : vector<64x128xf32>
      %cst_44 = arith.constant dense<0.000000e+00> : vector<128xf32>
      %91 = vector.multi_reduction <add>, %90, %cst_44 [0] : vector<64x128xf32> to vector<128xf32>
      %92 = vector.shape_cast %91 : vector<128xf32> to vector<1x128xf32>
      %93 = arith.addf %89, %92 : vector<1x128xf32>
      %c1_45 = arith.constant 1 : index
      %c0_46 = arith.constant 0 : index
      %94 = vector.load %arg11[%c1_45, %c0_46] : memref<2x128xf32, #tpu.memory_space<vmem>>, vector<1x128xf32>
      tpu.vector_store %arg11[%c1_45, %c0_46], %93 {strides = array<i32>} : memref<2x128xf32, #tpu.memory_space<vmem>>, vector<1x128xf32>,
    } else {
    }
    %c1_i32 = arith.constant 1 : i32
    %81 = arith.cmpi eq, %arg0, %c1_i32 : i32
    %82 = arith.extui %81 : i1 to i32
    %cst_35 = arith.constant 6.400000e+01 : f32
    %c0_i32_36 = arith.constant 0 : i32
    %83 = arith.cmpi ne, %82, %c0_i32_36 : i32
    scf.if %83 {
      %c0_37 = arith.constant 0 : index
      %c0_38 = arith.constant 0 : index
      %84 = vector.load %arg11[%c0_37, %c0_38] : memref<2x128xf32, #tpu.memory_space<vmem>>, vector<1x128xf32>
      %cst_39 = arith.constant 1.000000e+00 : f32
      %85 = arith.divf %cst_39, %cst_35 : f32
      %86 = vector.broadcast %85 : f32 to vector<1x128xf32>
      %87 = arith.mulf %84, %86 : vector<1x128xf32>
      %c1_40 = arith.constant 1 : index
      %c0_41 = arith.constant 0 : index
      %88 = vector.load %arg11[%c1_40, %c0_41] : memref<2x128xf32, #tpu.memory_space<vmem>>, vector<1x128xf32>
      %cst_42 = arith.constant 1.000000e+00 : f32
      %89 = arith.divf %cst_42, %cst_35 : f32
      %90 = vector.broadcast %89 : f32 to vector<1x128xf32>
      %91 = arith.mulf %88, %90 : vector<1x128xf32>
      %92 = arith.mulf %87, %87 : vector<1x128xf32>
      %93 = arith.subf %91, %92 : vector<1x128xf32>
      %cst_43 = arith.constant 0.000000e+00 : f32
      %94 = vector.broadcast %cst_43 : f32 to vector<1x128xf32>
      %95 = arith.maximumf %93, %94 : vector<1x128xf32>
      %cst_44 = arith.constant 9.99999974E-6 : f32
      %96 = vector.broadcast %cst_44 : f32 to vector<1x128xf32>
      %97 = arith.addf %95, %96 : vector<1x128xf32>
      %98 = math.rsqrt %97 : vector<1x128xf32>
      %99 = arith.mulf %6, %98 : vector<1x128xf32>
      %100 = arith.mulf %87, %99 : vector<1x128xf32>
      %101 = arith.subf %7, %100 : vector<1x128xf32>
      %102 = vector.broadcast %99 : vector<1x128xf32> to vector<64x128xf32>
      %103 = arith.mulf %77, %102 : vector<64x128xf32>
      %104 = vector.broadcast %101 : vector<1x128xf32> to vector<64x128xf32>
      %105 = arith.addf %103, %104 : vector<64x128xf32>
      %cst_45 = arith.constant 0.000000e+00 : f32
      %106 = vector.broadcast %cst_45 : f32 to vector<64x128xf32>
      %107 = arith.cmpf ogt, %105, %106 : vector<64x128xf32>
      %cst_46 = arith.constant 0.00999999977 : f32
      %108 = vector.broadcast %cst_46 : f32 to vector<64x128xf32>
      %109 = arith.mulf %108, %105 : vector<64x128xf32>
      %110 = arith.select %107, %105, %109 : vector<64x128xi1>, vector<64x128xf32>
      %c0_47 = arith.constant 0 : index
      %c0_48 = arith.constant 0 : index
      %111 = vector.load %arg7[%c0_47, %c0_48] : memref<128x1xf32, #tpu.memory_space<vmem>>, vector<128x1xf32>
      %cst_49 = arith.constant dense<0.000000e+00> : vector<64x1xf32>
      %112 = tpu.matmul %110, %111, %cst_49 {dimension_numbers = #tpu.dot_dimension_numbers<[1], [0], [0], [1], [0, 0, 1, 1], [], []>} : vector<64x128xf32>, vector<128x1xf32>, vector<64x1xf32> -> vector<64x1xf32>
      %c0_50 = arith.constant 0 : index
      %c0_51 = arith.constant 0 : index
      %113 = vector.load %arg9[%c0_50, %c0_51] : memref<64x1xf32, #tpu.memory_space<vmem>>, vector<64x1xf32>
      tpu.vector_store %arg9[%c0_50, %c0_51], %112 {strides = array<i32>} : memref<64x1xf32, #tpu.memory_space<vmem>>, vector<64x1xf32>,
    } else {
    }
    return
  }
  func.func @transform_0(%arg0: i32, %arg1: i32) -> (i32, i32) {
    %c0_i32 = arith.constant 0 : i32
    %c0_i32_0 = arith.constant 0 : i32
    %c0_i32_1 = arith.constant 0 : i32
    return %c0_i32, %c0_i32_0 : i32, i32
  }
  func.func @transform_1(%arg0: i32, %arg1: i32) -> (i32, i32) {
    %c0_i32 = arith.constant 0 : i32
    %c0_i32_0 = arith.constant 0 : i32
    return %arg1, %c0_i32 : i32, i32
  }
  func.func @transform_2(%arg0: i32, %arg1: i32) -> (i32, i32) {
    %c0_i32 = arith.constant 0 : i32
    %c0_i32_0 = arith.constant 0 : i32
    %c0_i32_1 = arith.constant 0 : i32
    return %c0_i32, %c0_i32_0 : i32, i32
  }
  func.func @transform_3(%arg0: i32, %arg1: i32) -> (i32, i32) {
    %c0_i32 = arith.constant 0 : i32
    %c0_i32_0 = arith.constant 0 : i32
    %c0_i32_1 = arith.constant 0 : i32
    return %c0_i32, %c0_i32_0 : i32, i32
  }
  func.func @transform_4(%arg0: i32, %arg1: i32) -> (i32, i32) {
    %c0_i32 = arith.constant 0 : i32
    %c0_i32_0 = arith.constant 0 : i32
    %c0_i32_1 = arith.constant 0 : i32
    return %c0_i32, %c0_i32_0 : i32, i32
  }
  func.func @transform_5(%arg0: i32, %arg1: i32) -> (i32, i32) {
    %c0_i32 = arith.constant 0 : i32
    %c0_i32_0 = arith.constant 0 : i32
    %c0_i32_1 = arith.constant 0 : i32
    return %c0_i32, %c0_i32_0 : i32, i32
  }
  func.func @transform_6(%arg0: i32, %arg1: i32) -> (i32, i32) {
    %c0_i32 = arith.constant 0 : i32
    %c0_i32_0 = arith.constant 0 : i32
    %c0_i32_1 = arith.constant 0 : i32
    return %c0_i32, %c0_i32_0 : i32, i32
  }
  func.func @transform_7(%arg0: i32, %arg1: i32) -> (i32, i32) {
    %c0_i32 = arith.constant 0 : i32
    %c0_i32_0 = arith.constant 0 : i32
    return %arg1, %c0_i32 : i32, i32
  }
}

module attributes {stable_mosaic.version = 11 : i64} {
  func.func @_coupling_kernel(%arg0: i32, %arg1: memref<8x8xf32, #tpu.memory_space<vmem>>, %arg2: memref<8x8xf32, #tpu.memory_space<vmem>>, %arg3: memref<8x1xf32, #tpu.memory_space<vmem>>, %arg4: memref<8x8xf32, #tpu.memory_space<vmem>>, %arg5: memref<1x8xf32, #tpu.memory_space<vmem>>) attributes {dimension_semantics = [#tpu.dimension_semantics<arbitrary>], iteration_bounds = array<i64: 1>, scalar_prefetch = 0 : i64, scratch_operands = 0 : i64, tpu.core_type = #tpu.core_type<tc>, window_params = [{pipeline_mode = #tpu.pipeline_mode<synchronous>, transform_indices = @transform_0, window_bounds = array<i64: 8, 8>}, {pipeline_mode = #tpu.pipeline_mode<synchronous>, transform_indices = @transform_1, window_bounds = array<i64: 8, 8>}, {pipeline_mode = #tpu.pipeline_mode<synchronous>, transform_indices = @transform_2, window_bounds = array<i64: 8, 1>}, {pipeline_mode = #tpu.pipeline_mode<synchronous>, transform_indices = @transform_3, window_bounds = array<i64: 8, 8>}, {pipeline_mode = #tpu.pipeline_mode<synchronous>, transform_indices = @transform_4, window_bounds = array<i64: 1, 8>}]} {
    %c0 = arith.constant 0 : index
    %c0_0 = arith.constant 0 : index
    %0 = vector.load %arg1[%c0, %c0_0] : memref<8x8xf32, #tpu.memory_space<vmem>>, vector<8x8xf32>
    %cst = arith.constant dense<0xFF800000> : vector<8xf32>
    %1 = vector.multi_reduction <maximumf>, %0, %cst [1] : vector<8x8xf32> to vector<8xf32>
    %2 = vector.shape_cast %1 : vector<8xf32> to vector<8x1xf32>
    %cst_1 = arith.constant dense<0xFF800000> : vector<1xf32>
    %3 = vector.multi_reduction <maximumf>, %2, %cst_1 [0] : vector<8x1xf32> to vector<1xf32>
    %4 = vector.shape_cast %3 : vector<1xf32> to vector<1x1xf32>
    %5 = vector.broadcast %4 : vector<1x1xf32> to vector<8x8xf32>
    %6 = arith.subf %0, %5 : vector<8x8xf32>
    %7 = math.exp %6 : vector<8x8xf32>
    %cst_2 = arith.constant dense<0.000000e+00> : vector<8xf32>
    %8 = vector.multi_reduction <add>, %7, %cst_2 [1] : vector<8x8xf32> to vector<8xf32>
    %9 = vector.shape_cast %8 : vector<8xf32> to vector<8x1xf32>
    %cst_3 = arith.constant dense<0.000000e+00> : vector<1xf32>
    %10 = vector.multi_reduction <add>, %9, %cst_3 [0] : vector<8x1xf32> to vector<1xf32>
    %11 = vector.shape_cast %10 : vector<1xf32> to vector<1x1xf32>
    %cst_4 = arith.constant 8.000000e+00 : f32
    %12 = vector.broadcast %cst_4 : f32 to vector<1x1xf32>
    %13 = arith.divf %12, %11 : vector<1x1xf32>
    %c0_5 = arith.constant 0 : index
    %c0_6 = arith.constant 0 : index
    %14 = vector.load %arg2[%c0_5, %c0_6] : memref<8x8xf32, #tpu.memory_space<vmem>>, vector<8x8xf32>
    %15 = vector.broadcast %4 : vector<1x1xf32> to vector<8x8xf32>
    %16 = arith.subf %14, %15 : vector<8x8xf32>
    %17 = math.exp %16 : vector<8x8xf32>
    %18 = arith.addf %7, %17 : vector<8x8xf32>
    %cst_7 = arith.constant 5.000000e-01 : f32
    %19 = vector.broadcast %cst_7 : f32 to vector<8x8xf32>
    %20 = arith.mulf %19, %18 : vector<8x8xf32>
    %c0_8 = arith.constant 0 : index
    %c0_9 = arith.constant 0 : index
    %21 = vector.load %arg4[%c0_8, %c0_9] : memref<8x8xf32, #tpu.memory_space<vmem>>, vector<1x8xf32>
    %c1 = arith.constant 1 : index
    %c0_10 = arith.constant 0 : index
    %22 = vector.load %arg4[%c1, %c0_10] : memref<8x8xf32, #tpu.memory_space<vmem>>, vector<1x8xf32>
    %c2 = arith.constant 2 : index
    %c0_11 = arith.constant 0 : index
    %23 = vector.load %arg4[%c2, %c0_11] : memref<8x8xf32, #tpu.memory_space<vmem>>, vector<1x8xf32>
    %c0_12 = arith.constant 0 : index
    %c0_13 = arith.constant 0 : index
    %24 = vector.load %arg3[%c0_12, %c0_13] : memref<8x1xf32, #tpu.memory_space<vmem>>, vector<8x1xf32>
    %25 = vector.broadcast %24 : vector<8x1xf32> to vector<8x8xf32>
    %26 = vector.broadcast %23 : vector<1x8xf32> to vector<8x8xf32>
    %27 = arith.subf %25, %26 : vector<8x8xf32>
    %28 = math.sin %27 : vector<8x8xf32>
    %29 = arith.mulf %20, %28 : vector<8x8xf32>
    %cst_14 = arith.constant dense<0.000000e+00> : vector<8xf32>
    %30 = vector.multi_reduction <add>, %29, %cst_14 [0] : vector<8x8xf32> to vector<8xf32>
    %31 = vector.shape_cast %30 : vector<8xf32> to vector<1x8xf32>
    %32 = vector.broadcast %13 : vector<1x1xf32> to vector<1x8xf32>
    %33 = arith.mulf %32, %31 : vector<1x8xf32>
    %34 = arith.addf %22, %33 : vector<1x8xf32>
    %35 = math.sin %23 : vector<1x8xf32>
    %36 = arith.mulf %21, %35 : vector<1x8xf32>
    %37 = arith.addf %34, %36 : vector<1x8xf32>
    %c0_15 = arith.constant 0 : index
    %c0_16 = arith.constant 0 : index
    %38 = vector.load %arg5[%c0_15, %c0_16] : memref<1x8xf32, #tpu.memory_space<vmem>>, vector<1x8xf32>
    tpu.vector_store %arg5[%c0_15, %c0_16], %37 {strides = array<i32>} : memref<1x8xf32, #tpu.memory_space<vmem>>, vector<1x8xf32>,
    return
  }
  func.func @transform_0(%arg0: i32) -> (i32, i32) {
    %c0_i32 = arith.constant 0 : i32
    %c0_i32_0 = arith.constant 0 : i32
    %c0_i32_1 = arith.constant 0 : i32
    return %c0_i32, %c0_i32_0 : i32, i32
  }
  func.func @transform_1(%arg0: i32) -> (i32, i32) {
    %c0_i32 = arith.constant 0 : i32
    %c0_i32_0 = arith.constant 0 : i32
    %c0_i32_1 = arith.constant 0 : i32
    return %c0_i32, %c0_i32_0 : i32, i32
  }
  func.func @transform_2(%arg0: i32) -> (i32, i32) {
    %c0_i32 = arith.constant 0 : i32
    %c0_i32_0 = arith.constant 0 : i32
    %c0_i32_1 = arith.constant 0 : i32
    return %c0_i32, %c0_i32_0 : i32, i32
  }
  func.func @transform_3(%arg0: i32) -> (i32, i32) {
    %c0_i32 = arith.constant 0 : i32
    %c0_i32_0 = arith.constant 0 : i32
    %c0_i32_1 = arith.constant 0 : i32
    return %c0_i32, %c0_i32_0 : i32, i32
  }
  func.func @transform_4(%arg0: i32) -> (i32, i32) {
    %c0_i32 = arith.constant 0 : i32
    %c0_i32_0 = arith.constant 0 : i32
    %c0_i32_1 = arith.constant 0 : i32
    return %c0_i32, %c0_i32_0 : i32, i32
  }
}

</mosaic_0001>

<llo_original>
// kernel: kuranet_full_forward.3
$region0: #{kuranet_full_forward.3}
  #allocation0 [shape = 'u32[]', space=smem, size = 0x4, offset = 0x4, fixed_abs, tag = 'smem constant byte address 0x4 - core index']
  #allocation1 [shape = 'u32[144,128]{1,0:T(1,128)}', space=vmem, size = 0x12000, scoped, tag = 'internal scratch']
  %s0 = inlined_call_operand.vmem [shape: f32[8,8], index: 0, kind: input, shape index: {}]
  %s1 = inlined_call_operand.vmem [shape: f32[8,8], index: 1, kind: input, shape index: {}]
  %s2 = inlined_call_operand.vmem [shape: f32[8,1], index: 2, kind: input, shape index: {}]
  %s3 = inlined_call_operand.vmem [shape: f32[8,8], index: 3, kind: input, shape index: {}]
  %s4 = inlined_call_operand.vmem [shape: f32[1,8], index: 4, kind: output, shape index: {}]
  %s5 = sld [smem:[#allocation0]]
  $region26: #{kuranet_full_forward.3} parent=0
    _
  %s7 = ssub.s32 1, %s5
  %s8 = scalar_select 0, %s7, %s5
  // Predicated region
  $region2: #{kuranet_full_forward.3} parent=0 // pred_check
    _
  $region3: #{kuranet_full_forward.3} parent=0 // pred_check_branch
    %10 = sbr.rel (0) target = $region5
  $region4: #{kuranet_full_forward.3} parent=0 // pred_region
    _
  $region5: #{kuranet_full_forward.3} parent=0 // pred_fallthru
    _
  // Predicated region
  $region6: #{kuranet_full_forward.3} parent=0 // pred_check
    _
  $region7: #{kuranet_full_forward.3} parent=0 // pred_check_branch
    %12 = sbr.rel (0) target = $region9
  $region8: #{kuranet_full_forward.3} parent=0 // pred_region
    _
  $region9: #{kuranet_full_forward.3} parent=0 // pred_fallthru
    _
  // Predicated region
  $region10: #{kuranet_full_forward.3} parent=0 // pred_check
    _
  $region11: #{kuranet_full_forward.3} parent=0 // pred_check_branch
    %14 = sbr.rel (0) target = $region13
  $region12: #{kuranet_full_forward.3} parent=0 // pred_region
    _
  $region13: #{kuranet_full_forward.3} parent=0 // pred_fallthru
    _
  // Predicated region
  $region14: #{kuranet_full_forward.3} parent=0 // pred_check
    _
  $region15: #{kuranet_full_forward.3} parent=0 // pred_check_branch
    %16 = sbr.rel (0) target = $region17
  $region16: #{kuranet_full_forward.3} parent=0 // pred_region
    _
  $region17: #{kuranet_full_forward.3} parent=0 // pred_fallthru
    _
  %v17 = vld [vmem:[%s0] sm:$0xff]
  %vm18 = vcmask 64512
  %v19 = vsel %vm18, %v17, -inf
  %20 = vmax.xlane.f32.xlu0 %v19
  %v21 = vpop.xlane.xlu0 %20
  %v22 = vrot.slane %v21, 4
  %v23 = vmax.f32 %v21, %v22
  %v24 = vrot.slane %v23, 2
  %v25 = vmax.f32 %v23, %v24
  %v26 = vrot.slane %v25, 1
  %v27 = vmax.f32 %v25, %v26
  %v28 = vsub.f32 %v17, %v27
  %v29 = vmul.f32 %v28, 1.442695
  %v30 = vpow.pop %v29
  %v31 = vsel %vm18, %v30, 0.0
  %32 = vadd.xlane.f32.xlu0 %v31
  %v33 = vpop.xlane.xlu0 %32
  %v34 = vrot.slane %v33, 4
  %v35 = vadd.f32 %v33, %v34
  %v36 = vrot.slane %v35, 2
  %v37 = vadd.f32 %v35, %v36
  %v38 = vrot.slane %v37, 1
  %v39 = vadd.f32 %v37, %v38
  %v40 = vrcp.pop %v39
  %v41 = vmul.f32 8.0, %v40
  %v42 = vld [vmem:[%s1] sm:$0xff]
  %v43 = vsub.f32 %v42, %v27
  %v44 = vmul.f32 %v43, 1.442695
  %v45 = vpow.pop %v44
  %v46 = vadd.f32 %v30, %v45
  %v47 = vmul.f32 %v46, 0.5
  %v48 = vld [vmem:[%s3] sm:$0x1]
  %v49 = vld [vmem:[%s3 + $0x1] sm:$0x1]
  %v50 = vld [vmem:[%s3 + $0x2] sm:$0x1]
  %v51 = vld [vmem:[%s2] sm:$0xff]
  %53 = vset.pattern.permute.xlu0 0
  %54 = vperm.xlu0 %53, %v51
  %v55 = vpop.permute.xlu0 %54
  %v57 = vlaneseq
  %v58 = vshrl.u32 %v57, 7
  %v59 = vsub.s32 0, %v58
  %v60 = vrot.slane %v50, %v59
  %v61 = vsub.f32 %v55, %v60
  %v62 = vand.u32 2147483647, %v61
  %vm63 = vcmp.le.f32.partialorder %v62, 0.7853982
  %vm64 = vcmp.lt.s32.totalorder %v61, 0
  %v65 = vand.u32 %v61, 2139095040
  %v66 = vshrl.u32 %v65, 23
  %v67 = vsub.s32 %v66, 127
  %v68 = vand.u32 2147483647, %v61
  %v69 = vand.u32 %v68, 8388607
  %v70 = vor.u32 %v69, 8388608
  %v71 = vsub.s32 0, %v70
  %v72 = vadd.s32 %v67, 1
  %vm73 = vcmp.gt.s32.totalorder %v72, 0
  %v74 = vsel %vm73, %v72, 0
  %v75 = vshrl.u32 %v74, 5
  %v76 = vand.u32 %v74, 31
  %v77 = vsub.s32 32, %v76
  %v78 = vshrl.u32 683565275, %v77
  %v79 = vshll.u32 683565275, %v76
  %v80 = vshrl.u32 2475754826, %v77
  %v81 = vor.u32 %v79, %v80
  %v82 = vshll.u32 2475754826, %v76
  %v83 = vshrl.u32 2131351028, %v77
  %v84 = vor.u32 %v82, %v83
  %v85 = vshll.u32 2131351028, %v76
  %v86 = vshrl.u32 2102212464, %v77
  %v87 = vor.u32 %v85, %v86
  %v88 = vshll.u32 2102212464, %v76
  %v89 = vshrl.u32 920167782, %v77
  %v90 = vor.u32 %v88, %v89
  %v91 = vshll.u32 920167782, %v76
  %v92 = vshrl.u32 1326507024, %v77
  %v93 = vor.u32 %v91, %v92
  %vm94 = vcmp.lt.s32.totalorder %v75, 1
  %vm95 = vcmp.lt.s32.totalorder %v75, 2
  %vm96 = vcmp.lt.s32.totalorder %v75, 3
  %vm97 = vcmp.lt.s32.totalorder %v75, 4
  %v98 = vsel %vm94, %v78, %v81
  %v99 = vsel %vm97, %v87, 2102212464
  %v100 = vsel %vm96, %v84, %v99
  %v101 = vsel %vm95, %v98, %v100
  %v102 = vsel %vm94, %v81, %v84
  %v103 = vsel %vm97, %v90, 920167782
  %v104 = vsel %vm96, %v87, %v103
  %v105 = vsel %vm95, %v102, %v104
  %v106 = vsel %vm94, %v84, %v87
  %v107 = vsel %vm97, %v93, 1326507024
  %v108 = vsel %vm96, %v90, %v107
  %v109 = vsel %vm95, %v106, %v108
  %v110 = vshll.u32 %v70, 8
  %v111 = vmul.u32.u64.compose %v110, %v109
  %v112 = vextract.low.u32 %v111
  %v113 = vextract.high.u32 %v111
  %v114 = vmul.u32.u64.compose %v110, %v105
  %v115 = vextract.low.u32 %v114
  %v116 = vextract.high.u32 %v114
  %v117 = vmul.u32 %v110, %v101
  %v118 = vadd.s32 %v113, %v115
  %vm119 = vc.u32 %v113, %v115
  %v120 = vadd.s32 %v116, 1
  %v121 = vsel %vm119, %v120, %v116
  %v122 = vadd.s32 %v117, %v121
  %v123 = vadd.s32 %v122, 536870912
  %v124 = vshrl.u32 %v123, 30
  %v125 = vshll.u32 %v124, 30
  %v126 = vsub.s32 %v122, %v125
  %vm127 = vcmp.lt.s32.totalorder %v126, 0
  %v128 = vsub.s32 0, %v126
  %v129 = vsel %vm127, %v128, %v126
  %v130 = vclz %v129
  %v131 = vsub.s32 %v130, 2
  %vm132 = vcmp.gt.s32.totalorder 0, %v131
  %v133 = vsel %vm132, 0, %v131
  %v134 = vsub.s32 32, %v133
  %v135 = vshll.u32 %v126, %v133
  %v136 = vshrl.u32 %v118, %v134
  %v137 = vor.u32 %v135, %v136
  %v138 = vsub.s32 4294967266, %v133
  %v139 = vadd.s32 %v138, 127
  %v140 = vshll.u32 %v139, 23
  %v141 = vor.u32 4788187, %v140
  %v142 = vand.u32 2147483647, %v141
  %v144 = vcvt.s32.f32 %v137
  %v145 = vmul.f32 %v144, %v142
  %v146 = vxor.u32 %v145, 2147483648
  %v147 = vsel %vm64, %v146, %v145
  %v148 = vsub.s32 4, %v124
  %v149 = vsel %vm64, %v148, %v124
  %v150 = vsel %vm63, %v61, %v147
  %v151 = vsel %vm63, 0, %v149
  %v152 = vcosq.f32.pop %v150
  %v153 = vsinq.f32.pop %v150
  %vm154 = vweird.f32 %v61
  %v155 = vadd.s32 %v151, 3
  %v156 = vand.u32 %v155, 3
  %vm157 = vcmp.lt.s32.totalorder %v156, 2
  %vm158 = vcmp.eq.s32.totalorder %v156, 0
  %v159 = vxor.u32 %v153, 2147483648
  %v160 = vsel %vm158, %v152, %v159
  %vm161 = vcmp.eq.s32.totalorder %v156, 2
  %v162 = vxor.u32 %v152, 2147483648
  %v163 = vsel %vm161, %v162, %v153
  %v164 = vsel %vm157, %v160, %v163
  %v165 = vsel %vm154, nan, %v164
  %v166 = vmul.f32 %v47, %v165
  %v167 = vsel %vm18, %v166, 0.0
  %v168 = vrot.slane %v167, 4
  %v169 = vadd.f32 %v167, %v168
  %v170 = vrot.slane %v169, 2
  %v171 = vadd.f32 %v169, %v170
  %v172 = vrot.slane %v171, 1
  %v173 = vadd.f32 %v171, %v172
  %v174 = vmul.f32 %v41, %v173
  %v175 = vadd.f32 %v49, %v174
  %v176 = vand.u32 2147483647, %v50
  %vm177 = vcmp.le.f32.partialorder %v176, 0.7853982
  %vm178 = vcmp.lt.s32.totalorder %v50, 0
  %v179 = vand.u32 %v50, 2139095040
  %v180 = vshrl.u32 %v179, 23
  %v181 = vsub.s32 %v180, 127
  %v182 = vand.u32 2147483647, %v50
  %v183 = vand.u32 %v182, 8388607
  %v184 = vor.u32 %v183, 8388608
  %v185 = vsub.s32 0, %v184
  %v186 = vadd.s32 %v181, 1
  %vm187 = vcmp.gt.s32.totalorder %v186, 0
  %v188 = vsel %vm187, %v186, 0
  %v189 = vshrl.u32 %v188, 5
  %v190 = vand.u32 %v188, 31
  %v191 = vsub.s32 32, %v190
  %v192 = vshrl.u32 683565275, %v191
  %v193 = vshll.u32 683565275, %v190
  %v194 = vshrl.u32 2475754826, %v191
  %v195 = vor.u32 %v193, %v194
  %v196 = vshll.u32 2475754826, %v190
  %v197 = vshrl.u32 2131351028, %v191
  %v198 = vor.u32 %v196, %v197
  %v199 = vshll.u32 2131351028, %v190
  %v200 = vshrl.u32 2102212464, %v191
  %v201 = vor.u32 %v199, %v200
  %v202 = vshll.u32 2102212464, %v190
  %v203 = vshrl.u32 920167782, %v191
  %v204 = vor.u32 %v202, %v203
  %v205 = vshll.u32 920167782, %v190
  %v206 = vshrl.u32 1326507024, %v191
  %v207 = vor.u32 %v205, %v206
  %vm208 = vcmp.lt.s32.totalorder %v189, 1
  %vm209 = vcmp.lt.s32.totalorder %v189, 2
  %vm210 = vcmp.lt.s32.totalorder %v189, 3
  %vm211 = vcmp.lt.s32.totalorder %v189, 4
  %v212 = vsel %vm208, %v192, %v195
  %v213 = vsel %vm211, %v201, 2102212464
  %v214 = vsel %vm210, %v198, %v213
  %v215 = vsel %vm209, %v212, %v214
  %v216 = vsel %vm208, %v195, %v198
  %v217 = vsel %vm211, %v204, 920167782
  %v218 = vsel %vm210, %v201, %v217
  %v219 = vsel %vm209, %v216, %v218
  %v220 = vsel %vm208, %v198, %v201
  %v221 = vsel %vm211, %v207, 1326507024
  %v222 = vsel %vm210, %v204, %v221
  %v223 = vsel %vm209, %v220, %v222
  %v224 = vshll.u32 %v184, 8
  %v225 = vmul.u32.u64.compose %v224, %v223
  %v226 = vextract.low.u32 %v225
  %v227 = vextract.high.u32 %v225
  %v228 = vmul.u32.u64.compose %v224, %v219
  %v229 = vextract.low.u32 %v228
  %v230 = vextract.high.u32 %v228
  %v231 = vmul.u32 %v224, %v215
  %v232 = vadd.s32 %v227, %v229
  %vm233 = vc.u32 %v227, %v229
  %v234 = vadd.s32 %v230, 1
  %v235 = vsel %vm233, %v234, %v230
  %v236 = vadd.s32 %v231, %v235
  %v237 = vadd.s32 %v236, 536870912
  %v238 = vshrl.u32 %v237, 30
  %v239 = vshll.u32 %v238, 30
  %v240 = vsub.s32 %v236, %v239
  %vm241 = vcmp.lt.s32.totalorder %v240, 0
  %v242 = vsub.s32 0, %v240
  %v243 = vsel %vm241, %v242, %v240
  %v244 = vclz %v243
  %v245 = vsub.s32 %v244, 2
  %vm246 = vcmp.gt.s32.totalorder 0, %v245
  %v247 = vsel %vm246, 0, %v245
  %v248 = vsub.s32 32, %v247
  %v249 = vshll.u32 %v240, %v247
  %v250 = vshrl.u32 %v232, %v248
  %v251 = vor.u32 %v249, %v250
  %v252 = vsub.s32 4294967266, %v247
  %v253 = vadd.s32 %v252, 127
  %v254 = vshll.u32 %v253, 23
  %v255 = vor.u32 4788187, %v254
  %v256 = vand.u32 2147483647, %v255
  %v258 = vcvt.s32.f32 %v251
  %v259 = vmul.f32 %v258, %v256
  %v260 = vxor.u32 %v259, 2147483648
  %v261 = vsel %vm178, %v260, %v259
  %v262 = vsub.s32 4, %v238
  %v263 = vsel %vm178, %v262, %v238
  %v264 = vsel %vm177, %v50, %v261
  %v265 = vsel %vm177, 0, %v263
  %v266 = vcosq.f32.pop %v264
  %v267 = vsinq.f32.pop %v264
  %vm268 = vweird.f32 %v50
  %v269 = vadd.s32 %v265, 3
  %v270 = vand.u32 %v269, 3
  %vm271 = vcmp.lt.s32.totalorder %v270, 2
  %vm272 = vcmp.eq.s32.totalorder %v270, 0
  %v273 = vxor.u32 %v267, 2147483648
  %v274 = vsel %vm272, %v266, %v273
  %vm275 = vcmp.eq.s32.totalorder %v270, 2
  %v276 = vxor.u32 %v266, 2147483648
  %v277 = vsel %vm275, %v276, %v267
  %v278 = vsel %vm271, %v274, %v277
  %v279 = vsel %vm268, nan, %v278
  %v280 = vmul.f32 %v48, %v279
  %v281 = vadd.f32 %v175, %v280
  %vm282 = vcmask 57344
  %283 = vst.msk [vmem:[%s4] sm:$0x1] %vm282, %v281
  // Predicated region
  $region18: #{kuranet_full_forward.3} parent=0 // pred_check
    _
  $region19: #{kuranet_full_forward.3} parent=0 // pred_check_branch
    %285 = sbr.rel (0) target = $region21
  $region20: #{kuranet_full_forward.3} parent=0 // pred_region
    _
  $region21: #{kuranet_full_forward.3} parent=0 // pred_fallthru
    _
  // Predicated region
  $region22: #{kuranet_full_forward.3} parent=0 // pred_check
    _
  $region23: #{kuranet_full_forward.3} parent=0 // pred_check_branch
    %287 = sbr.rel (0) target = $region25
  $region24: #{kuranet_full_forward.3} parent=0 // pred_region
    _
  $region25: #{kuranet_full_forward.3} parent=0 // pred_fallthru
    _

// kernel: kuranet_full_forward.2
$region0: #{kuranet_full_forward.2}
  #allocation0 [shape = 'u32[]', space=smem, size = 0x4, offset = 0x4, fixed_abs, tag = 'smem constant byte address 0x4 - core index']
  #allocation1 [shape = 'u32[144,128]{1,0:T(1,128)}', space=vmem, size = 0x12000, scoped, tag = 'internal scratch']
  #allocation2 [shape = 'f32[2,128]{1,0:T(2,128)}', space=vmem, size = 0x400, scoped, tag = 'scratch operand']
  #allocation3 [shape = 'f32[2,128]{1,0:T(2,128)}', space=vmem, size = 0x400, scoped, tag = 'scratch operand']
  %s0 = inlined_call_operand.vmem [shape: f32[8,4], index: 0, kind: input, shape index: {}]
  %s1 = inlined_call_operand.vmem [shape: f32[64,1], index: 1, kind: input, shape index: {}]
  %s2 = inlined_call_operand.vmem [shape: f32[4,128], index: 2, kind: input, shape index: {}]
  %s3 = inlined_call_operand.vmem [shape: f32[4,128], index: 3, kind: input, shape index: {}]
  %s4 = inlined_call_operand.vmem [shape: f32[128,128], index: 4, kind: input, shape index: {}]
  %s5 = inlined_call_operand.vmem [shape: f32[128,1], index: 5, kind: input, shape index: {}]
  %s6 = inlined_call_operand.vmem [shape: f32[8,128], index: 6, kind: input, shape index: {}]
  %s7 = inlined_call_operand.vmem [shape: f32[64,1], index: 7, kind: output, shape index: {}]
  %s8 = sld [smem:[#allocation0]]
  $region73: #{kuranet_full_forward.2} parent=0
    _
  %s10 = ssub.s32 1, %s8
  %s11 = scalar_select 0, %s10, %s8
  loop: start=0, step=1, limit=4
  $region2: #{kuranet_full_forward.2} parent=0 // loop_pre_header
    _
  $region3: #{kuranet_full_forward.2} parent=0 // loop_header
    %s13 = sphi 0, %s17
    %p14 = scmp.ge.s32.totalorder %s13, 4
    %s20 = sphi 0, %s32
    %s21 = sphi 0, %s28
    %s22 = sphi 0, %s20
    %s23 = sphi 0, %s21
    %s24 = sphi 0, %s22
    %s25 = sphi 0, %s23
    %s33 = sphi 0, %s33
    %s35 = sphi 0, %s33
    %s36 = sphi 0, %s35
    %s50 = sphi 0, %s36
    %s56 = sphi 0, %s58
    %s59 = sphi 0, %s56
    %s60 = sphi 0, %s59
    %s76 = sphi 0, %s60
    %s80 = sphi 0, %s80
    %s82 = sphi 0, %s80
    %s83 = sphi 0, %s82
    %s97 = sphi 0, %s83
    %s101 = sphi 0, %s101
    %s103 = sphi 0, %s101
    %s104 = sphi 0, %s103
    %s118 = sphi 0, %s104
    %s122 = sphi 0, %s122
    %s124 = sphi 0, %s122
    %s125 = sphi 0, %s124
    %s139 = sphi 0, %s125
    %s143 = sphi 0, %s143
    %s145 = sphi 0, %s143
    %s146 = sphi 0, %s145
    %s160 = sphi 0, %s146
    %s164 = sphi 0, %s164
    %s166 = sphi 0, %s164
    %s167 = sphi 0, %s166
    %s181 = sphi 0, %s167
    %s187 = sphi 0, %s189
    %s190 = sphi 0, %s187
    %s191 = sphi 0, %s190
    %s207 = sphi 0, %s191
  $region4: #{kuranet_full_forward.2} parent=0 // loop_header_branch
    %16 = sbr.rel (%p14) target = $region8
  $region5: #{kuranet_full_forward.2} parent=0 // loop_body
    %s18 = ssub.s32 %s13, 1
    %s19 = ssub.s32 %s13, 2
    %s26 = sadd.s32 1, %s21
    %p27 = scmp.ge.s32.totalorder %s26, 1
    %s28 = scalar_select %p27, 0, %s26
    %s29 = sadd.s32 1, %s20
    %s30 = scalar_select %p27, %s29, %s20
    %p31 = scmp.ge.s32.totalorder %s30, 2
    %s32 = scalar_select %p31, 0, %s30
    %s34 = sadd.s32 %s33, 1
    %p37 = scmp.eq.s32.totalorder %s13, 1
    %p38 = scmp.ne.s32.totalorder %s33, %s35
    %p39 = scmp.eq.s32.totalorder %s13, 0
    %p40 = por %p38, %p39
    %p41 = scmp.ne.s32.totalorder %s33, %s35
    %p42 = scmp.eq.s32.totalorder %s18, 1
    %p43 = por %p41, %p42
    %p44 = scmp.ne.s32.totalorder %s35, %s36
    %p45 = scmp.eq.s32.totalorder %s18, 0
    %p46 = por %p44, %p45
    %p47 = scmp.ne.s32.totalorder %s35, %s36
    %p48 = scmp.eq.s32.totalorder %s19, 1
    %p49 = por %p47, %p48
    %p51 = scmp.ne.s32.totalorder %s36, %s50
    %p52 = scmp.eq.s32.totalorder %s19, 0
    %p53 = por %p51, %p52
    %s54 = ssub.s32 %s21, %s28
    %p55 = scmp.eq.s32.totalorder %s54, 0
    %s57 = sadd.s32 %s56, 1
    %s58 = scalar_select %p55, %s56, %s57
    %p61 = pneg %p55
    %p62 = scmp.eq.s32.totalorder %s13, 1
    %p63 = por %p61, %p62
    %p64 = scmp.ne.s32.totalorder %s56, %s59
    %p65 = scmp.eq.s32.totalorder %s13, 0
    %p66 = por %p64, %p65
    %p67 = scmp.ne.s32.totalorder %s56, %s59
    %p68 = scmp.eq.s32.totalorder %s18, 1
    %p69 = por %p67, %p68
    %p70 = scmp.ne.s32.totalorder %s59, %s60
    %p71 = scmp.eq.s32.totalorder %s18, 0
    %p72 = por %p70, %p71
    %p73 = scmp.ne.s32.totalorder %s59, %s60
    %p74 = scmp.eq.s32.totalorder %s19, 1
    %p75 = por %p73, %p74
    %p77 = scmp.ne.s32.totalorder %s60, %s76
    %p78 = scmp.eq.s32.totalorder %s19, 0
    %p79 = por %p77, %p78
    %s81 = sadd.s32 %s80, 1
    %p84 = scmp.eq.s32.totalorder %s13, 1
    %p85 = scmp.ne.s32.totalorder %s80, %s82
    %p86 = scmp.eq.s32.totalorder %s13, 0
    %p87 = por %p85, %p86
    %p88 = scmp.ne.s32.totalorder %s80, %s82
    %p89 = scmp.eq.s32.totalorder %s18, 1
    %p90 = por %p88, %p89
    %p91 = scmp.ne.s32.totalorder %s82, %s83
    %p92 = scmp.eq.s32.totalorder %s18, 0
    %p93 = por %p91, %p92
    %p94 = scmp.ne.s32.totalorder %s82, %s83
    %p95 = scmp.eq.s32.totalorder %s19, 1
    %p96 = por %p94, %p95
    %p98 = scmp.ne.s32.totalorder %s83, %s97
    %p99 = scmp.eq.s32.totalorder %s19, 0
    %p100 = por %p98, %p99
    %s102 = sadd.s32 %s101, 1
    %p105 = scmp.eq.s32.totalorder %s13, 1
    %p106 = scmp.ne.s32.totalorder %s101, %s103
    %p107 = scmp.eq.s32.totalorder %s13, 0
    %p108 = por %p106, %p107
    %p109 = scmp.ne.s32.totalorder %s101, %s103
    %p110 = scmp.eq.s32.totalorder %s18, 1
    %p111 = por %p109, %p110
    %p112 = scmp.ne.s32.totalorder %s103, %s104
    %p113 = scmp.eq.s32.totalorder %s18, 0
    %p114 = por %p112, %p113
    %p115 = scmp.ne.s32.totalorder %s103, %s104
    %p116 = scmp.eq.s32.totalorder %s19, 1
    %p117 = por %p115, %p116
    %p119 = scmp.ne.s32.totalorder %s104, %s118
    %p120 = scmp.eq.s32.totalorder %s19, 0
    %p121 = por %p119, %p120
    %s123 = sadd.s32 %s122, 1
    %p126 = scmp.eq.s32.totalorder %s13, 1
    %p127 = scmp.ne.s32.totalorder %s122, %s124
    %p128 = scmp.eq.s32.totalorder %s13, 0
    %p129 = por %p127, %p128
    %p130 = scmp.ne.s32.totalorder %s122, %s124
    %p131 = scmp.eq.s32.totalorder %s18, 1
    %p132 = por %p130, %p131
    %p133 = scmp.ne.s32.totalorder %s124, %s125
    %p134 = scmp.eq.s32.totalorder %s18, 0
    %p135 = por %p133, %p134
    %p136 = scmp.ne.s32.totalorder %s124, %s125
    %p137 = scmp.eq.s32.totalorder %s19, 1
    %p138 = por %p136, %p137
    %p140 = scmp.ne.s32.totalorder %s125, %s139
    %p141 = scmp.eq.s32.totalorder %s19, 0
    %p142 = por %p140, %p141
    %s144 = sadd.s32 %s143, 1
    %p147 = scmp.eq.s32.totalorder %s13, 1
    %p148 = scmp.ne.s32.totalorder %s143, %s145
    %p149 = scmp.eq.s32.totalorder %s13, 0
    %p150 = por %p148, %p149
    %p151 = scmp.ne.s32.totalorder %s143, %s145
    %p152 = scmp.eq.s32.totalorder %s18, 1
    %p153 = por %p151, %p152
    %p154 = scmp.ne.s32.totalorder %s145, %s146
    %p155 = scmp.eq.s32.totalorder %s18, 0
    %p156 = por %p154, %p155
    %p157 = scmp.ne.s32.totalorder %s145, %s146
    %p158 = scmp.eq.s32.totalorder %s19, 1
    %p159 = por %p157, %p158
    %p161 = scmp.ne.s32.totalorder %s146, %s160
    %p162 = scmp.eq.s32.totalorder %s19, 0
    %p163 = por %p161, %p162
    %s165 = sadd.s32 %s164, 1
    %p168 = scmp.eq.s32.totalorder %s13, 1
    %p169 = scmp.ne.s32.totalorder %s164, %s166
    %p170 = scmp.eq.s32.totalorder %s13, 0
    %p171 = por %p169, %p170
    %p172 = scmp.ne.s32.totalorder %s164, %s166
    %p173 = scmp.eq.s32.totalorder %s18, 1
    %p174 = por %p172, %p173
    %p175 = scmp.ne.s32.totalorder %s166, %s167
    %p176 = scmp.eq.s32.totalorder %s18, 0
    %p177 = por %p175, %p176
    %p178 = scmp.ne.s32.totalorder %s166, %s167
    %p179 = scmp.eq.s32.totalorder %s19, 1
    %p180 = por %p178, %p179
    %p182 = scmp.ne.s32.totalorder %s167, %s181
    %p183 = scmp.eq.s32.totalorder %s19, 0
    %p184 = por %p182, %p183
    %s185 = ssub.s32 %s21, %s28
    %p186 = scmp.eq.s32.totalorder %s185, 0
    %s188 = sadd.s32 %s187, 1
    %s189 = scalar_select %p186, %s187, %s188
    %p192 = pneg %p186
    %p193 = scmp.eq.s32.totalorder %s13, 1
    %p194 = por %p192, %p193
    %p195 = scmp.ne.s32.totalorder %s187, %s190
    %p196 = scmp.eq.s32.totalorder %s13, 0
    %p197 = por %p195, %p196
    %p198 = scmp.ne.s32.totalorder %s187, %s190
    %p199 = scmp.eq.s32.totalorder %s18, 1
    %p200 = por %p198, %p199
    %p201 = scmp.ne.s32.totalorder %s190, %s191
    %p202 = scmp.eq.s32.totalorder %s18, 0
    %p203 = por %p201, %p202
    %p204 = scmp.ne.s32.totalorder %s190, %s191
    %p205 = scmp.eq.s32.totalorder %s19, 1
    %p206 = por %p204, %p205
    %p208 = scmp.ne.s32.totalorder %s191, %s207
    %p209 = scmp.eq.s32.totalorder %s19, 0
    %p210 = por %p208, %p209
    %p211 = scmp.le.s32.totalorder 1, %s13
    %p212 = scmp.lt.s32.totalorder %s13, 3
    %p213 = pnand %p211, %p212
    %p214 = pneg %p213
    // Predicated region
    $region9: #{kuranet_full_forward.2} parent=5 // pred_check
      _
    $region10: #{kuranet_full_forward.2} parent=5 // pred_check_branch
      %216 = sbr.rel (%p213) target = $region12
    $region11: #{kuranet_full_forward.2} parent=5 // pred_region
      %s217 = ssub.s32 %s13, 1
      // Predicated region
      $region13: #{kuranet_full_forward.2} parent=11 // pred_check
        %p218 = pneg %p46
      $region14: #{kuranet_full_forward.2} parent=11 // pred_check_branch
        %220 = sbr.rel (%p218) target = $region16
      $region15: #{kuranet_full_forward.2} parent=11 // pred_region
        _
      $region16: #{kuranet_full_forward.2} parent=11 // pred_fallthru
        _
      // Predicated region
      $region17: #{kuranet_full_forward.2} parent=11 // pred_check
        %p221 = pneg %p72
      $region18: #{kuranet_full_forward.2} parent=11 // pred_check_branch
        %223 = sbr.rel (%p221) target = $region20
      $region19: #{kuranet_full_forward.2} parent=11 // pred_region
        %s224 = smul.u32 8, %s23
        %p225 = scmp.lt.s32.totalorder %s224, 7
        %s226 = scalar_select %p225, %s224, 7
        %s227 = smul.addr %s226, 8
        %s228 = scalar_lea.vmem %s1, %s227
        %s229 = smul.u32 8, %s23
      $region20: #{kuranet_full_forward.2} parent=11 // pred_fallthru
        _
      // Predicated region
      $region21: #{kuranet_full_forward.2} parent=11 // pred_check
        %p230 = pneg %p93
      $region22: #{kuranet_full_forward.2} parent=11 // pred_check_branch
        %232 = sbr.rel (%p230) target = $region24
      $region23: #{kuranet_full_forward.2} parent=11 // pred_region
        _
      $region24: #{kuranet_full_forward.2} parent=11 // pred_fallthru
        _
      // Predicated region
      $region25: #{kuranet_full_forward.2} parent=11 // pred_check
        %p233 = pneg %p114
      $region26: #{kuranet_full_forward.2} parent=11 // pred_check_branch
        %235 = sbr.rel (%p233) target = $region28
      $region27: #{kuranet_full_forward.2} parent=11 // pred_region
        _
      $region28: #{kuranet_full_forward.2} parent=11 // pred_fallthru
        _
      // Predicated region
      $region29: #{kuranet_full_forward.2} parent=11 // pred_check
        %p236 = pneg %p135
      $region30: #{kuranet_full_forward.2} parent=11 // pred_check_branch
        %238 = sbr.rel (%p236) target = $region32
      $region31: #{kuranet_full_forward.2} parent=11 // pred_region
        _
      $region32: #{kuranet_full_forward.2} parent=11 // pred_fallthru
        _
      // Predicated region
      $region33: #{kuranet_full_forward.2} parent=11 // pred_check
        %p239 = pneg %p156
      $region34: #{kuranet_full_forward.2} parent=11 // pred_check_branch
        %241 = sbr.rel (%p239) target = $region36
      $region35: #{kuranet_full_forward.2} parent=11 // pred_region
        _
      $region36: #{kuranet_full_forward.2} parent=11 // pred_fallthru
        _
      // Predicated region
      $region37: #{kuranet_full_forward.2} parent=11 // pred_check
        %p242 = pneg %p177
      $region38: #{kuranet_full_forward.2} parent=11 // pred_check_branch
        %244 = sbr.rel (%p242) target = $region40
      $region39: #{kuranet_full_forward.2} parent=11 // pred_region
        _
      $region40: #{kuranet_full_forward.2} parent=11 // pred_fallthru
        _
    $region12: #{kuranet_full_forward.2} parent=5 // pred_fallthru
      _
    %p245 = scmp.lt.s32.totalorder %s13, 2
    // Predicated region
    $region41: #{kuranet_full_forward.2} parent=5 // pred_check
      %p246 = pneg %p245
    $region42: #{kuranet_full_forward.2} parent=5 // pred_check_branch
      %248 = sbr.rel (%p246) target = $region44
    $region43: #{kuranet_full_forward.2} parent=5 // pred_region
      _
    $region44: #{kuranet_full_forward.2} parent=5 // pred_fallthru
      _
    %p249 = scmp.le.s32.totalorder 1, %s13
    %p250 = scmp.lt.s32.totalorder %s13, 3
    %p251 = pnand %p249, %p250
    %p252 = pneg %p251
    // Predicated region
    $region45: #{kuranet_full_forward.2} parent=5 // pred_check
      _
    $region46: #{kuranet_full_forward.2} parent=5 // pred_check_branch
      %254 = sbr.rel (%p251) target = $region48
    $region47: #{kuranet_full_forward.2} parent=5 // pred_region
      %s255 = ssub.s32 %s13, 1
      %p256 = pneg %p46
      %p257 = pneg %p43
      %s258 = smul.u32 8, %s23
      %p259 = scmp.lt.s32.totalorder %s258, 7
      %s260 = scalar_select %p259, %s258, 7
      %s261 = smul.addr %s260, 8
      %s262 = scalar_lea.vmem %s1, %s261
      %p263 = pneg %p72
      %p264 = pneg %p69
      %p265 = pneg %p93
      %p266 = pneg %p90
      %p267 = pneg %p114
      %p268 = pneg %p111
      %p269 = pneg %p135
      %p270 = pneg %p132
      %p271 = pneg %p156
      %p272 = pneg %p153
      %p273 = pneg %p177
      %p274 = pneg %p174
      %p275 = pneg %p203
      %p276 = pneg %p200
      %s277 = smul.u32 8, %s23
      %p278 = scmp.lt.s32.totalorder %s277, 7
      %s279 = scalar_select %p278, %s277, 7
      %s280 = smul.addr %s279, 8
      %s281 = scalar_lea.vmem %s7, %s280
      %s282 = smul.u32 8, %s23
      %p283 = scmp.lt.s32.totalorder %s282, 7
      %s284 = scalar_select %p283, %s282, 7
      %s285 = smul.addr %s284, 8
      %s286 = scalar_lea.vmem %s1, %s285
      %s287 = smul.u32 8, %s23
      %s288 = smul.u32 8, %s23
      %p289 = scmp.lt.s32.totalorder %s288, 7
      %s290 = scalar_select %p289, %s288, 7
      %s291 = smul.addr %s290, 8
      %s292 = scalar_lea.vmem %s7, %s291
      %s293 = smul.u32 8, %s23
      %s294 = smul.u32 %s23, 8
      %v295 = vld [vmem:[%s6] sm:$0x1]
      %v296 = vld [vmem:[%s6 + $0x1] sm:$0x1]
      %v297 = vld [vmem:[%s6 + $0x2] sm:$0x1]
      %v298 = vld [vmem:[%s6 + $0x3] sm:$0x1]
      %v299 = vld [vmem:[%s6 + $0x4] sm:$0x1]
      %v300 = vld [vmem:[%s6 + $0x5] sm:$0x1]
      %v301 = vld [vmem:[%s0] sm:$0xff]
      %s302 = scalar_lea.vmem %s0, %s294
      %v303 = vld [vmem:[%s302] sm:$0xff]
      %v304 = vld [vmem:[%s3] sm:$0xf]
      %vm305 = vcmask 31744
      %v307 = vsel %vm305, %v301, 0
      %vm309 = vcmask 1043456
      %v311 = vsel %vm309, %v304, 0
      %313 = vmatprep.subr.mxu0 0.0
      %314 = vmatpush1.msra.mxu0 0.0
      %315 = vmatprep.subr.mxu0 0.0
      %316 = vmatpush1.msra.mxu0 0.0
      %317 = vmatprep.subr.mxu0 0.0
      %318 = vmatpush1.msra.mxu0 0.0
      %319 = vmatprep.subr.mxu0 0.0
      %320 = vmatpush1.msra.mxu0 0.0
      %321 = vmatprep.subr.mxu0 0.0
      %322 = vmatpush1.msra.mxu0 0.0
      %323 = vmatprep.subr.mxu0 0.0
      %324 = vmatpush1.msra.mxu0 0.0
      %325 = vmatprep.subr.mxu0 0.0
      %326 = vmatpush1.msra.mxu0 0.0
      %327 = vmatprep.subr.mxu0 0.0
      %328 = vmatpush1.msra.mxu0 0.0
      %329 = vmatprep.subr.mxu0 0.0
      %330 = vmatpush1.msra.mxu0 0.0
      %331 = vmatprep.subr.mxu0 0.0
      %332 = vmatpush1.msra.mxu0 0.0
      %333 = vmatprep.subr.mxu0 0.0
      %334 = vmatpush1.msra.mxu0 0.0
      %335 = vmatprep.subr.mxu0 0.0
      %336 = vmatpush1.msra.mxu0 0.0
      %337 = vmatprep.subr.mxu0 0.0
      %338 = vmatpush1.msra.mxu0 0.0
      %339 = vmatprep.subr.mxu0 0.0
      %340 = vmatpush1.msra.mxu0 0.0
      %341 = vmatprep.subr.mxu0 0.0
      %342 = vmatpush1.msra.mxu0 0.0
      %343 = vmatprep.subr.mxu0 0.0
      %344 = vmatpush1.msra.mxu0 %v311
      %345 = vmatprep.subr.mxu0 0.0
      %346 = vmatpush2.msra.mxu0 0.0
      %347 = vmatprep.subr.mxu0 0.0
      %348 = vmatpush2.msra.mxu0 0.0
      %349 = vmatprep.subr.mxu0 0.0
      %350 = vmatpush2.msra.mxu0 0.0
      %351 = vmatprep.subr.mxu0 0.0
      %352 = vmatpush2.msra.mxu0 0.0
      %353 = vmatprep.subr.mxu0 0.0
      %354 = vmatpush2.msra.mxu0 0.0
      %355 = vmatprep.subr.mxu0 0.0
      %356 = vmatpush2.msra.mxu0 0.0
      %357 = vmatprep.subr.mxu0 0.0
      %358 = vmatpush2.msra.mxu0 0.0
      %359 = vmatprep.subr.mxu0 0.0
      %360 = vmatpush2.msra.mxu0 0.0
      %361 = vmatprep.subr.mxu0 0.0
      %362 = vmatpush2.msra.mxu0 0.0
      %363 = vmatprep.subr.mxu0 0.0
      %364 = vmatpush2.msra.mxu0 0.0
      %365 = vmatprep.subr.mxu0 0.0
      %366 = vmatpush2.msra.mxu0 0.0
      %367 = vmatprep.subr.mxu0 0.0
      %368 = vmatpush2.msra.mxu0 0.0
      %369 = vmatprep.subr.mxu0 0.0
      %370 = vmatpush2.msra.mxu0 0.0
      %371 = vmatprep.subr.mxu0 0.0
      %372 = vmatpush2.msra.mxu0 0.0
      %373 = vmatprep.subr.mxu0 0.0
      %374 = vmatpush2.msra.mxu0 0.0
      %375 = vmatprep.subr.mxu0 0.0
      %376 = vmatpush2.msra.mxu0 0.0
      %377 = vmatprep.mubr.f32.mxu0 0.0
      %378 = vmatmul.mubr.f32.gmra.mxu0 %v307
      %v379 = vpop.f32.mrf.mxu0
      %v380 = vadd.f32 0.0, %v379
      %v381 = vpop.f32.mrf.mxu0
      %382 = vdwg.mxu0
      %v383 = vld [vmem:[%s2] sm:$0xf]
      %v385 = vsel %vm305, %v303, 0
      %v388 = vsel %vm309, %v383, 0
      %390 = vmatprep.subr.mxu0 0.0
      %391 = vmatpush1.msra.mxu0 0.0
      %392 = vmatprep.subr.mxu0 0.0
      %393 = vmatpush1.msra.mxu0 0.0
      %394 = vmatprep.subr.mxu0 0.0
      %395 = vmatpush1.msra.mxu0 0.0
      %396 = vmatprep.subr.mxu0 0.0
      %397 = vmatpush1.msra.mxu0 0.0
      %398 = vmatprep.subr.mxu0 0.0
      %399 = vmatpush1.msra.mxu0 0.0
      %400 = vmatprep.subr.mxu0 0.0
      %401 = vmatpush1.msra.mxu0 0.0
      %402 = vmatprep.subr.mxu0 0.0
      %403 = vmatpush1.msra.mxu0 0.0
      %404 = vmatprep.subr.mxu0 0.0
      %405 = vmatpush1.msra.mxu0 0.0
      %406 = vmatprep.subr.mxu0 0.0
      %407 = vmatpush1.msra.mxu0 0.0
      %408 = vmatprep.subr.mxu0 0.0
      %409 = vmatpush1.msra.mxu0 0.0
      %410 = vmatprep.subr.mxu0 0.0
      %411 = vmatpush1.msra.mxu0 0.0
      %412 = vmatprep.subr.mxu0 0.0
      %413 = vmatpush1.msra.mxu0 0.0
      %414 = vmatprep.subr.mxu0 0.0
      %415 = vmatpush1.msra.mxu0 0.0
      %416 = vmatprep.subr.mxu0 0.0
      %417 = vmatpush1.msra.mxu0 0.0
      %418 = vmatprep.subr.mxu0 0.0
      %419 = vmatpush1.msra.mxu0 0.0
      %420 = vmatprep.subr.mxu0 0.0
      %421 = vmatpush1.msra.mxu0 %v388
      %422 = vmatprep.subr.mxu0 0.0
      %423 = vmatpush2.msra.mxu0 0.0
      %424 = vmatprep.subr.mxu0 0.0
      %425 = vmatpush2.msra.mxu0 0.0
      %426 = vmatprep.subr.mxu0 0.0
      %427 = vmatpush2.msra.mxu0 0.0
      %428 = vmatprep.subr.mxu0 0.0
      %429 = vmatpush2.msra.mxu0 0.0
      %430 = vmatprep.subr.mxu0 0.0
      %431 = vmatpush2.msra.mxu0 0.0
      %432 = vmatprep.subr.mxu0 0.0
      %433 = vmatpush2.msra.mxu0 0.0
      %434 = vmatprep.subr.mxu0 0.0
      %435 = vmatpush2.msra.mxu0 0.0
      %436 = vmatprep.subr.mxu0 0.0
      %437 = vmatpush2.msra.mxu0 0.0
      %438 = vmatprep.subr.mxu0 0.0
      %439 = vmatpush2.msra.mxu0 0.0
      %440 = vmatprep.subr.mxu0 0.0
      %441 = vmatpush2.msra.mxu0 0.0
      %442 = vmatprep.subr.mxu0 0.0
      %443 = vmatpush2.msra.mxu0 0.0
      %444 = vmatprep.subr.mxu0 0.0
      %445 = vmatpush2.msra.mxu0 0.0
      %446 = vmatprep.subr.mxu0 0.0
      %447 = vmatpush2.msra.mxu0 0.0
      %448 = vmatprep.subr.mxu0 0.0
      %449 = vmatpush2.msra.mxu0 0.0
      %450 = vmatprep.subr.mxu0 0.0
      %451 = vmatpush2.msra.mxu0 0.0
      %452 = vmatprep.subr.mxu0 0.0
      %453 = vmatpush2.msra.mxu0 0.0
      %454 = vmatprep.mubr.f32.mxu0 0.0
      %455 = vmatmul.mubr.f32.gmra.mxu0 %v385
      %v456 = vpop.f32.mrf.mxu0
      %v457 = vadd.f32 0.0, %v456
      %v458 = vpop.f32.mrf.mxu0
      %459 = vdwg.mxu0
      %p460 = scmp.eq.s32.totalorder %s22, 0
      %p461 = scmp.eq.s32.totalorder %s23, 0
      %p462 = pnand %p460, %p461
      %p463 = pneg %p462
      // Predicated region
      $region49: #{kuranet_full_forward.2} parent=47 // pred_check
        _
      $region50: #{kuranet_full_forward.2} parent=47 // pred_check_branch
        %465 = sbr.rel (%p462) target = $region52
      $region51: #{kuranet_full_forward.2} parent=47 // pred_region
        %v466 = vld [vmem:[%s2] sm:$0xf]
        %v468 = vsel %vm309, %v466, 0
        %470 = vmatprep.subr.mxu0 0.0
        %471 = vmatpush1.msra.mxu0 0.0
        %472 = vmatprep.subr.mxu0 0.0
        %473 = vmatpush1.msra.mxu0 0.0
        %474 = vmatprep.subr.mxu0 0.0
        %475 = vmatpush1.msra.mxu0 0.0
        %476 = vmatprep.subr.mxu0 0.0
        %477 = vmatpush1.msra.mxu0 0.0
        %478 = vmatprep.subr.mxu0 0.0
        %479 = vmatpush1.msra.mxu0 0.0
        %480 = vmatprep.subr.mxu0 0.0
        %481 = vmatpush1.msra.mxu0 0.0
        %482 = vmatprep.subr.mxu0 0.0
        %483 = vmatpush1.msra.mxu0 0.0
        %484 = vmatprep.subr.mxu0 0.0
        %485 = vmatpush1.msra.mxu0 0.0
        %486 = vmatprep.subr.mxu0 0.0
        %487 = vmatpush1.msra.mxu0 0.0
        %488 = vmatprep.subr.mxu0 0.0
        %489 = vmatpush1.msra.mxu0 0.0
        %490 = vmatprep.subr.mxu0 0.0
        %491 = vmatpush1.msra.mxu0 0.0
        %492 = vmatprep.subr.mxu0 0.0
        %493 = vmatpush1.msra.mxu0 0.0
        %494 = vmatprep.subr.mxu0 0.0
        %495 = vmatpush1.msra.mxu0 0.0
        %496 = vmatprep.subr.mxu0 0.0
        %497 = vmatpush1.msra.mxu0 0.0
        %498 = vmatprep.subr.mxu0 0.0
        %499 = vmatpush1.msra.mxu0 0.0
        %500 = vmatprep.subr.mxu0 0.0
        %501 = vmatpush1.msra.mxu0 %v468
        %502 = vmatprep.subr.mxu0 0.0
        %503 = vmatpush2.msra.mxu0 0.0
        %504 = vmatprep.subr.mxu0 0.0
        %505 = vmatpush2.msra.mxu0 0.0
        %506 = vmatprep.subr.mxu0 0.0
        %507 = vmatpush2.msra.mxu0 0.0
        %508 = vmatprep.subr.mxu0 0.0
        %509 = vmatpush2.msra.mxu0 0.0
        %510 = vmatprep.subr.mxu0 0.0
        %511 = vmatpush2.msra.mxu0 0.0
        %512 = vmatprep.subr.mxu0 0.0
        %513 = vmatpush2.msra.mxu0 0.0
        %514 = vmatprep.subr.mxu0 0.0
        %515 = vmatpush2.msra.mxu0 0.0
        %516 = vmatprep.subr.mxu0 0.0
        %517 = vmatpush2.msra.mxu0 0.0
        %518 = vmatprep.subr.mxu0 0.0
        %519 = vmatpush2.msra.mxu0 0.0
        %520 = vmatprep.subr.mxu0 0.0
        %521 = vmatpush2.msra.mxu0 0.0
        %522 = vmatprep.subr.mxu0 0.0
        %523 = vmatpush2.msra.mxu0 0.0
        %524 = vmatprep.subr.mxu0 0.0
        %525 = vmatpush2.msra.mxu0 0.0
        %526 = vmatprep.subr.mxu0 0.0
        %527 = vmatpush2.msra.mxu0 0.0
        %528 = vmatprep.subr.mxu0 0.0
        %529 = vmatpush2.msra.mxu0 0.0
        %530 = vmatprep.subr.mxu0 0.0
        %531 = vmatpush2.msra.mxu0 0.0
        %532 = vmatprep.subr.mxu0 0.0
        %533 = vmatpush2.msra.mxu0 0.0
        %534 = vmatprep.mubr.f32.mxu0 0.0
        %535 = vmatmul.mubr.f32.gmra.mxu0 %v307
        %v536 = vpop.f32.mrf.mxu0
        %v537 = vadd.f32 0.0, %v536
        %v538 = vpop.f32.mrf.mxu0
        %539 = vdwg.mxu0
        %v540 = vrot.slane %v537, 4
        %v541 = vadd.f32 %v537, %v540
        %v542 = vrot.slane %v541, 2
        %v543 = vadd.f32 %v541, %v542
        %v544 = vrot.slane %v543, 1
        %v545 = vadd.f32 %v543, %v544
        %v546 = vrot.slane %v380, 4
        %v547 = vadd.f32 %v380, %v546
        %v548 = vrot.slane %v547, 2
        %v549 = vadd.f32 %v547, %v548
        %v550 = vrot.slane %v549, 1
        %v551 = vadd.f32 %v549, %v550
        %v552 = vmul.f32 %v537, %v537
        %v553 = vrot.slane %v552, 4
        %v554 = vadd.f32 %v552, %v553
        %v555 = vrot.slane %v554, 2
        %v556 = vadd.f32 %v554, %v555
        %v557 = vrot.slane %v556, 1
        %v558 = vadd.f32 %v556, %v557
        %v559 = vmul.f32 %v380, %v380
        %v560 = vrot.slane %v559, 4
        %v561 = vadd.f32 %v559, %v560
        %v562 = vrot.slane %v561, 2
        %v563 = vadd.f32 %v561, %v562
        %v564 = vrot.slane %v563, 1
        %v565 = vadd.f32 %v563, %v564
        %v566 = vmul.f32 %v545, 8.0
        %v567 = vmul.f32 %v551, 8.0
        %v568 = vadd.f32 %v566, %v567
        %v569 = vmul.f32 %v295, 64.0
        %v570 = vadd.f32 %v568, %v569
        %571 = vst [vmem:[#allocation2] sm:$0x1] %v570
        %v572 = vmul.f32 %v558, 8.0
        %v573 = vmul.f32 %v565, 8.0
        %v574 = vadd.f32 %v572, %v573
        %v575 = vmul.f32 %v295, %v295
        %v576 = vmul.f32 %v575, 64.0
        %v577 = vadd.f32 %v574, %v576
        %v578 = vmul.f32 %v545, 2.0
        %v579 = vmul.f32 %v578, %v551
        %v580 = vadd.f32 %v577, %v579
        %v581 = vmul.f32 %v295, %v545
        %v582 = vmul.f32 %v581, 16.0
        %v583 = vadd.f32 %v580, %v582
        %v584 = vmul.f32 %v295, %v551
        %v585 = vmul.f32 %v584, 16.0
        %v586 = vadd.f32 %v583, %v585
        %587 = vst [vmem:[#allocation2 + $0x1] sm:$0x1] %v586
        %588 = vst [vmem:[#allocation3] sm:$0x3] 0.0
      $region52: #{kuranet_full_forward.2} parent=47 // pred_fallthru
        _
      %v589 = vld [vmem:[#allocation2] sm:$0x1]
      %v590 = vmul.f32 %v589, 0.015625
      %v591 = vld [vmem:[#allocation2 + $0x1] sm:$0x1]
      %v592 = vmul.f32 %v591, 0.015625
      %v593 = vmul.f32 %v590, %v590
      %v594 = vsub.f32 %v592, %v593
      %v595 = vmax.f32 %v594, 0.0
      %v596 = vadd.f32 %v595, 1e-05
      %v597 = vrsqrt.pop %v596
      %v598 = vmul.f32 %v296, %v597
      %v599 = vmul.f32 %v590, %v598
      %v600 = vsub.f32 %v297, %v599
      %v601 = vlaneseq
      %v602 = vshrl.u32 %v601, 7
      %v603 = vsub.s32 0, %v602
      %v604 = vrot.slane %v295, %v603
      %v605 = vadd.f32 %v380, %v604
      %v606 = vlaneseq
      %v607 = vshrl.u32 %v606, 7
      %v608 = vsub.s32 0, %v607
      %v609 = vrot.slane %v457, %v608
      %v610 = vadd.f32 %v609, %v605
      %v611 = vlaneseq
      %v612 = vshrl.u32 %v611, 7
      %v613 = vsub.s32 1, %v612
      %v614 = vrot.slane %v457, %v613
      %v615 = vadd.f32 %v614, %v605
      %v616 = vlaneseq
      %v617 = vshrl.u32 %v616, 7
      %v618 = vsub.s32 2, %v617
      %v619 = vrot.slane %v457, %v618
      %v620 = vadd.f32 %v619, %v605
      %v621 = vlaneseq
      %v622 = vshrl.u32 %v621, 7
      %v623 = vsub.s32 3, %v622
      %v624 = vrot.slane %v457, %v623
      %v625 = vadd.f32 %v624, %v605
      %v626 = vlaneseq
      %v627 = vshrl.u32 %v626, 7
      %v628 = vsub.s32 4, %v627
      %v629 = vrot.slane %v457, %v628
      %v630 = vadd.f32 %v629, %v605
      %v631 = vlaneseq
      %v632 = vshrl.u32 %v631, 7
      %v633 = vsub.s32 5, %v632
      %v634 = vrot.slane %v457, %v633
      %v635 = vadd.f32 %v634, %v605
      %v636 = vlaneseq
      %v637 = vshrl.u32 %v636, 7
      %v638 = vsub.s32 6, %v637
      %v639 = vrot.slane %v457, %v638
      %v640 = vadd.f32 %v639, %v605
      %v641 = vlaneseq
      %v642 = vshrl.u32 %v641, 7
      %v643 = vsub.s32 7, %v642
      %v644 = vrot.slane %v457, %v643
      %v645 = vadd.f32 %v644, %v605
      %v646 = vlaneseq
      %v647 = vshrl.u32 %v646, 7
      %v648 = vsub.s32 0, %v647
      %v649 = vrot.slane %v598, %v648
      %v650 = vmul.f32 %v610, %v649
      %v651 = vmul.f32 %v615, %v649
      %v652 = vmul.f32 %v620, %v649
      %v653 = vmul.f32 %v625, %v649
      %v654 = vmul.f32 %v630, %v649
      %v655 = vmul.f32 %v635, %v649
      %v656 = vmul.f32 %v640, %v649
      %v657 = vmul.f32 %v645, %v649
      %v658 = vlaneseq
      %v659 = vshrl.u32 %v658, 7
      %v660 = vsub.s32 0, %v659
      %v661 = vrot.slane %v600, %v660
      %v662 = vadd.f32 %v650, %v661
      %v663 = vadd.f32 %v651, %v661
      %v664 = vadd.f32 %v652, %v661
      %v665 = vadd.f32 %v653, %v661
      %v666 = vadd.f32 %v654, %v661
      %v667 = vadd.f32 %v655, %v661
      %v668 = vadd.f32 %v656, %v661
      %v669 = vadd.f32 %v657, %v661
      %vm670 = vcmp.gt.f32.partialorder %v662, 0.0
      %vm671 = vcmp.gt.f32.partialorder %v663, 0.0
      %vm672 = vcmp.gt.f32.partialorder %v664, 0.0
      %vm673 = vcmp.gt.f32.partialorder %v665, 0.0
      %vm674 = vcmp.gt.f32.partialorder %v666, 0.0
      %vm675 = vcmp.gt.f32.partialorder %v667, 0.0
      %vm676 = vcmp.gt.f32.partialorder %v668, 0.0
      %vm677 = vcmp.gt.f32.partialorder %v669, 0.0
      %v678 = vmul.f32 %v662, 0.01
      %v679 = vmul.f32 %v663, 0.01
      %v680 = vmul.f32 %v664, 0.01
      %v681 = vmul.f32 %v665, 0.01
      %v682 = vmul.f32 %v666, 0.01
      %v683 = vmul.f32 %v667, 0.01
      %v684 = vmul.f32 %v668, 0.01
      %v685 = vmul.f32 %v669, 0.01
      %v686 = vsel %vm670, %v662, %v678
      %v687 = vsel %vm671, %v663, %v679
      %v688 = vsel %vm672, %v664, %v680
      %v689 = vsel %vm673, %v665, %v681
      %v690 = vsel %vm674, %v666, %v682
      %v691 = vsel %vm675, %v667, %v683
      %v692 = vsel %vm676, %v668, %v684
      %v693 = vsel %vm677, %v669, %v685
      %v694 = vld [vmem:[%s4] sm:$0xff]
      %v695 = vld [vmem:[%s4 + $0x8] sm:$0xff]
      %v696 = vld [vmem:[%s4 + $0x10] sm:$0xff]
      %v697 = vld [vmem:[%s4 + $0x18] sm:$0xff]
      %v698 = vld [vmem:[%s4 + $0x20] sm:$0xff]
      %v699 = vld [vmem:[%s4 + $0x28] sm:$0xff]
      %v700 = vld [vmem:[%s4 + $0x30] sm:$0xff]
      %v701 = vld [vmem:[%s4 + $0x38] sm:$0xff]
      %v702 = vld [vmem:[%s4 + $0x40] sm:$0xff]
      %v703 = vld [vmem:[%s4 + $0x48] sm:$0xff]
      %v704 = vld [vmem:[%s4 + $0x50] sm:$0xff]
      %v705 = vld [vmem:[%s4 + $0x58] sm:$0xff]
      %v706 = vld [vmem:[%s4 + $0x60] sm:$0xff]
      %v707 = vld [vmem:[%s4 + $0x68] sm:$0xff]
      %v708 = vld [vmem:[%s4 + $0x70] sm:$0xff]
      %v709 = vld [vmem:[%s4 + $0x78] sm:$0xff]
      %v710 = vlaneseq
      %v711 = vshrl.u32 %v710, 7
      %v712 = vsub.s32 0, %v711
      %v713 = vrot.slane %v298, %v712
      %714 = vmatprep.subr.mxu0 0.0
      %715 = vmatpush1.msra.mxu0 %v709
      %716 = vmatprep.subr.mxu0 0.0
      %717 = vmatpush1.msra.mxu0 %v708
      %718 = vmatprep.subr.mxu0 0.0
      %719 = vmatpush1.msra.mxu0 %v707
      %720 = vmatprep.subr.mxu0 0.0
      %721 = vmatpush1.msra.mxu0 %v706
      %722 = vmatprep.subr.mxu0 0.0
      %723 = vmatpush1.msra.mxu0 %v705
      %724 = vmatprep.subr.mxu0 0.0
      %725 = vmatpush1.msra.mxu0 %v704
      %726 = vmatprep.subr.mxu0 0.0
      %727 = vmatpush1.msra.mxu0 %v703
      %728 = vmatprep.subr.mxu0 0.0
      %729 = vmatpush1.msra.mxu0 %v702
      %730 = vmatprep.subr.mxu0 0.0
      %731 = vmatpush1.msra.mxu0 %v701
      %732 = vmatprep.subr.mxu0 0.0
      %733 = vmatpush1.msra.mxu0 %v700
      %734 = vmatprep.subr.mxu0 0.0
      %735 = vmatpush1.msra.mxu0 %v699
      %736 = vmatprep.subr.mxu0 0.0
      %737 = vmatpush1.msra.mxu0 %v698
      %738 = vmatprep.subr.mxu0 0.0
      %739 = vmatpush1.msra.mxu0 %v697
      %740 = vmatprep.subr.mxu0 0.0
      %741 = vmatpush1.msra.mxu0 %v696
      %742 = vmatprep.subr.mxu0 0.0
      %743 = vmatpush1.msra.mxu0 %v695
      %744 = vmatprep.subr.mxu0 0.0
      %745 = vmatpush1.msra.mxu0 %v694
      %746 = vmatprep.subr.mxu0 0.0
      %747 = vmatpush2.msra.mxu0 0.0
      %748 = vmatprep.subr.mxu0 0.0
      %749 = vmatpush2.msra.mxu0 0.0
      %750 = vmatprep.subr.mxu0 0.0
      %751 = vmatpush2.msra.mxu0 0.0
      %752 = vmatprep.subr.mxu0 0.0
      %753 = vmatpush2.msra.mxu0 0.0
      %754 = vmatprep.subr.mxu0 0.0
      %755 = vmatpush2.msra.mxu0 0.0
      %756 = vmatprep.subr.mxu0 0.0
      %757 = vmatpush2.msra.mxu0 0.0
      %758 = vmatprep.subr.mxu0 0.0
      %759 = vmatpush2.msra.mxu0 0.0
      %760 = vmatprep.subr.mxu0 0.0
      %761 = vmatpush2.msra.mxu0 0.0
      %762 = vmatprep.subr.mxu0 0.0
      %763 = vmatpush2.msra.mxu0 0.0
      %764 = vmatprep.subr.mxu0 0.0
      %765 = vmatpush2.msra.mxu0 0.0
      %766 = vmatprep.subr.mxu0 0.0
      %767 = vmatpush2.msra.mxu0 0.0
      %768 = vmatprep.subr.mxu0 0.0
      %769 = vmatpush2.msra.mxu0 0.0
      %770 = vmatprep.subr.mxu0 0.0
      %771 = vmatpush2.msra.mxu0 0.0
      %772 = vmatprep.subr.mxu0 0.0
      %773 = vmatpush2.msra.mxu0 0.0
      %774 = vmatprep.subr.mxu0 0.0
      %775 = vmatpush2.msra.mxu0 0.0
      %776 = vmatprep.subr.mxu0 0.0
      %777 = vmatpush2.msra.mxu0 0.0
      %778 = vmatprep.mubr.f32.mxu0 0.0
      %779 = vmatmul.mubr.f32.gmra.mxu0 %v686
      %v780 = vpop.f32.mrf.mxu0
      %v781 = vadd.f32 %v713, %v780
      %v782 = vpop.f32.mrf.mxu0
      %783 = vmatprep.mubr.f32.mxu0 0.0
      %784 = vmatmul.mubr.f32.gmra.mxu0 %v687
      %v785 = vpop.f32.mrf.mxu0
      %v786 = vadd.f32 %v713, %v785
      %v787 = vpop.f32.mrf.mxu0
      %788 = vmatprep.mubr.f32.mxu0 0.0
      %789 = vmatmul.mubr.f32.gmra.mxu0 %v688
      %v790 = vpop.f32.mrf.mxu0
      %v791 = vadd.f32 %v713, %v790
      %v792 = vpop.f32.mrf.mxu0
      %793 = vmatprep.mubr.f32.mxu0 0.0
      %794 = vmatmul.mubr.f32.gmra.mxu0 %v689
      %v795 = vpop.f32.mrf.mxu0
      %v796 = vadd.f32 %v713, %v795
      %v797 = vpop.f32.mrf.mxu0
      %798 = vmatprep.mubr.f32.mxu0 0.0
      %799 = vmatmul.mubr.f32.gmra.mxu0 %v690
      %v800 = vpop.f32.mrf.mxu0
      %v801 = vadd.f32 %v713, %v800
      %v802 = vpop.f32.mrf.mxu0
      %803 = vmatprep.mubr.f32.mxu0 0.0
      %804 = vmatmul.mubr.f32.gmra.mxu0 %v691
      %v805 = vpop.f32.mrf.mxu0
      %v806 = vadd.f32 %v713, %v805
      %v807 = vpop.f32.mrf.mxu0
      %808 = vmatprep.mubr.f32.mxu0 0.0
      %809 = vmatmul.mubr.f32.gmra.mxu0 %v692
      %v810 = vpop.f32.mrf.mxu0
      %v811 = vadd.f32 %v713, %v810
      %v812 = vpop.f32.mrf.mxu0
      %813 = vmatprep.mubr.f32.mxu0 0.0
      %814 = vmatmul.mubr.f32.gmra.mxu0 %v693
      %v815 = vpop.f32.mrf.mxu0
      %v816 = vadd.f32 %v713, %v815
      %v817 = vpop.f32.mrf.mxu0
      %818 = vdwg.mxu0
      // Predicated region
      $region53: #{kuranet_full_forward.2} parent=47 // pred_check
        %p819 = pneg %p460
      $region54: #{kuranet_full_forward.2} parent=47 // pred_check_branch
        %821 = sbr.rel (%p819) target = $region56
      $region55: #{kuranet_full_forward.2} parent=47 // pred_region
        %v822 = vld [vmem:[#allocation3] sm:$0x1]
        %v823 = vadd.f32 %v781, %v786
        %v824 = vadd.f32 %v823, %v791
        %v825 = vadd.f32 %v824, %v796
        %v826 = vadd.f32 %v825, %v801
        %v827 = vadd.f32 %v826, %v806
        %v828 = vadd.f32 %v827, %v811
        %v829 = vadd.f32 %v828, %v816
        %v830 = vrot.slane %v829, 4
        %v831 = vadd.f32 %v829, %v830
        %v832 = vrot.slane %v831, 2
        %v833 = vadd.f32 %v831, %v832
        %v834 = vrot.slane %v833, 1
        %v835 = vadd.f32 %v833, %v834
        %v836 = vadd.f32 %v822, %v835
        %837 = vst [vmem:[#allocation3] sm:$0x1] %v836
        %v838 = vld [vmem:[#allocation3 + $0x1] sm:$0x1]
        %v839 = vmul.f32 %v781, %v781
        %v840 = vmul.f32 %v786, %v786
        %v841 = vmul.f32 %v791, %v791
        %v842 = vmul.f32 %v796, %v796
        %v843 = vmul.f32 %v801, %v801
        %v844 = vmul.f32 %v806, %v806
        %v845 = vmul.f32 %v811, %v811
        %v846 = vmul.f32 %v816, %v816
        %v847 = vadd.f32 %v839, %v840
        %v848 = vadd.f32 %v847, %v841
        %v849 = vadd.f32 %v848, %v842
        %v850 = vadd.f32 %v849, %v843
        %v851 = vadd.f32 %v850, %v844
        %v852 = vadd.f32 %v851, %v845
        %v853 = vadd.f32 %v852, %v846
        %v854 = vrot.slane %v853, 4
        %v855 = vadd.f32 %v853, %v854
        %v856 = vrot.slane %v855, 2
        %v857 = vadd.f32 %v855, %v856
        %v858 = vrot.slane %v857, 1
        %v859 = vadd.f32 %v857, %v858
        %v860 = vadd.f32 %v838, %v859
        %861 = vst [vmem:[#allocation3 + $0x1] sm:$0x1] %v860
      $region56: #{kuranet_full_forward.2} parent=47 // pred_fallthru
        _
      %p862 = scmp.eq.s32.totalorder %s22, 1
      // Predicated region
      $region57: #{kuranet_full_forward.2} parent=47 // pred_check
        %p863 = pneg %p862
      $region58: #{kuranet_full_forward.2} parent=47 // pred_check_branch
        %865 = sbr.rel (%p863) target = $region60
      $region59: #{kuranet_full_forward.2} parent=47 // pred_region
        %v866 = vld [vmem:[#allocation3] sm:$0x1]
        %v867 = vmul.f32 %v866, 0.015625
        %v868 = vld [vmem:[#allocation3 + $0x1] sm:$0x1]
        %v869 = vmul.f32 %v868, 0.015625
        %v870 = vmul.f32 %v867, %v867
        %v871 = vsub.f32 %v869, %v870
        %v872 = vmax.f32 %v871, 0.0
        %v873 = vadd.f32 %v872, 1e-05
        %v874 = vrsqrt.pop %v873
        %v875 = vmul.f32 %v299, %v874
        %v876 = vmul.f32 %v867, %v875
        %v877 = vsub.f32 %v300, %v876
        %v878 = vlaneseq
        %v879 = vshrl.u32 %v878, 7
        %v880 = vsub.s32 0, %v879
        %v881 = vrot.slane %v875, %v880
        %v882 = vmul.f32 %v781, %v881
        %v883 = vmul.f32 %v786, %v881
        %v884 = vmul.f32 %v791, %v881
        %v885 = vmul.f32 %v796, %v881
        %v886 = vmul.f32 %v801, %v881
        %v887 = vmul.f32 %v806, %v881
        %v888 = vmul.f32 %v811, %v881
        %v889 = vmul.f32 %v816, %v881
        %v890 = vlaneseq
        %v891 = vshrl.u32 %v890, 7
        %v892 = vsub.s32 0, %v891
        %v893 = vrot.slane %v877, %v892
        %v894 = vadd.f32 %v882, %v893
        %v895 = vadd.f32 %v883, %v893
        %v896 = vadd.f32 %v884, %v893
        %v897 = vadd.f32 %v885, %v893
        %v898 = vadd.f32 %v886, %v893
        %v899 = vadd.f32 %v887, %v893
        %v900 = vadd.f32 %v888, %v893
        %v901 = vadd.f32 %v889, %v893
        %vm902 = vcmp.gt.f32.partialorder %v894, 0.0
        %vm903 = vcmp.gt.f32.partialorder %v895, 0.0
        %vm904 = vcmp.gt.f32.partialorder %v896, 0.0
        %vm905 = vcmp.gt.f32.partialorder %v897, 0.0
        %vm906 = vcmp.gt.f32.partialorder %v898, 0.0
        %vm907 = vcmp.gt.f32.partialorder %v899, 0.0
        %vm908 = vcmp.gt.f32.partialorder %v900, 0.0
        %vm909 = vcmp.gt.f32.partialorder %v901, 0.0
        %v910 = vmul.f32 %v894, 0.01
        %v911 = vmul.f32 %v895, 0.01
        %v912 = vmul.f32 %v896, 0.01
        %v913 = vmul.f32 %v897, 0.01
        %v914 = vmul.f32 %v898, 0.01
        %v915 = vmul.f32 %v899, 0.01
        %v916 = vmul.f32 %v900, 0.01
        %v917 = vmul.f32 %v901, 0.01
        %v918 = vsel %vm902, %v894, %v910
        %v919 = vsel %vm903, %v895, %v911
        %v920 = vsel %vm904, %v896, %v912
        %v921 = vsel %vm905, %v897, %v913
        %v922 = vsel %vm906, %v898, %v914
        %v923 = vsel %vm907, %v899, %v915
        %v924 = vsel %vm908, %v900, %v916
        %v925 = vsel %vm909, %v901, %v917
        %v926 = vld [vmem:[%s5] sm:$0xff]
        %v927 = vld [vmem:[%s5 + $0x8] sm:$0xff]
        %v928 = vld [vmem:[%s5 + $0x10] sm:$0xff]
        %v929 = vld [vmem:[%s5 + $0x18] sm:$0xff]
        %v930 = vld [vmem:[%s5 + $0x20] sm:$0xff]
        %v931 = vld [vmem:[%s5 + $0x28] sm:$0xff]
        %v932 = vld [vmem:[%s5 + $0x30] sm:$0xff]
        %v933 = vld [vmem:[%s5 + $0x38] sm:$0xff]
        %v934 = vld [vmem:[%s5 + $0x40] sm:$0xff]
        %v935 = vld [vmem:[%s5 + $0x48] sm:$0xff]
        %v936 = vld [vmem:[%s5 + $0x50] sm:$0xff]
        %v937 = vld [vmem:[%s5 + $0x58] sm:$0xff]
        %v938 = vld [vmem:[%s5 + $0x60] sm:$0xff]
        %v939 = vld [vmem:[%s5 + $0x68] sm:$0xff]
        %v940 = vld [vmem:[%s5 + $0x70] sm:$0xff]
        %v941 = vld [vmem:[%s5 + $0x78] sm:$0xff]
        %942 = vmatprep.subr.mxu0 0.0
        %943 = vmatpush1.msra.mxu0 %v941
        %944 = vmatprep.subr.mxu0 0.0
        %945 = vmatpush1.msra.mxu0 %v940
        %946 = vmatprep.subr.mxu0 0.0
        %947 = vmatpush1.msra.mxu0 %v939
        %948 = vmatprep.subr.mxu0 0.0
        %949 = vmatpush1.msra.mxu0 %v938
        %950 = vmatprep.subr.mxu0 0.0
        %951 = vmatpush1.msra.mxu0 %v937
        %952 = vmatprep.subr.mxu0 0.0
        %953 = vmatpush1.msra.mxu0 %v936
        %954 = vmatprep.subr.mxu0 0.0
        %955 = vmatpush1.msra.mxu0 %v935
        %956 = vmatprep.subr.mxu0 0.0
        %957 = vmatpush1.msra.mxu0 %v934
        %958 = vmatprep.subr.mxu0 0.0
        %959 = vmatpush1.msra.mxu0 %v933
        %960 = vmatprep.subr.mxu0 0.0
        %961 = vmatpush1.msra.mxu0 %v932
        %962 = vmatprep.subr.mxu0 0.0
        %963 = vmatpush1.msra.mxu0 %v931
        %964 = vmatprep.subr.mxu0 0.0
        %965 = vmatpush1.msra.mxu0 %v930
        %966 = vmatprep.subr.mxu0 0.0
        %967 = vmatpush1.msra.mxu0 %v929
        %968 = vmatprep.subr.mxu0 0.0
        %969 = vmatpush1.msra.mxu0 %v928
        %970 = vmatprep.subr.mxu0 0.0
        %971 = vmatpush1.msra.mxu0 %v927
        %972 = vmatprep.subr.mxu0 0.0
        %973 = vmatpush1.msra.mxu0 %v926
        %974 = vmatprep.subr.mxu0 0.0
        %975 = vmatpush2.msra.mxu0 0.0
        %976 = vmatprep.subr.mxu0 0.0
        %977 = vmatpush2.msra.mxu0 0.0
        %978 = vmatprep.subr.mxu0 0.0
        %979 = vmatpush2.msra.mxu0 0.0
        %980 = vmatprep.subr.mxu0 0.0
        %981 = vmatpush2.msra.mxu0 0.0
        %982 = vmatprep.subr.mxu0 0.0
        %983 = vmatpush2.msra.mxu0 0.0
        %984 = vmatprep.subr.mxu0 0.0
        %985 = vmatpush2.msra.mxu0 0.0
        %986 = vmatprep.subr.mxu0 0.0
        %987 = vmatpush2.msra.mxu0 0.0
        %988 = vmatprep.subr.mxu0 0.0
        %989 = vmatpush2.msra.mxu0 0.0
        %990 = vmatprep.subr.mxu0 0.0
        %991 = vmatpush2.msra.mxu0 0.0
        %992 = vmatprep.subr.mxu0 0.0
        %993 = vmatpush2.msra.mxu0 0.0
        %994 = vmatprep.subr.mxu0 0.0
        %995 = vmatpush2.msra.mxu0 0.0
        %996 = vmatprep.subr.mxu0 0.0
        %997 = vmatpush2.msra.mxu0 0.0
        %998 = vmatprep.subr.mxu0 0.0
        %999 = vmatpush2.msra.mxu0 0.0
        %1000 = vmatprep.subr.mxu0 0.0
        %1001 = vmatpush2.msra.mxu0 0.0
        %1002 = vmatprep.subr.mxu0 0.0
        %1003 = vmatpush2.msra.mxu0 0.0
        %1004 = vmatprep.subr.mxu0 0.0
        %1005 = vmatpush2.msra.mxu0 0.0
        %1006 = vmatprep.mubr.f32.mxu0 0.0
        %1007 = vmatmul.mubr.f32.gmra.mxu0 %v918
        %v1008 = vpop.f32.mrf.mxu0
        %v1009 = vadd.f32 0.0, %v1008
        %v1010 = vpop.f32.mrf.mxu0
        %1011 = vmatprep.mubr.f32.mxu0 0.0
        %1012 = vmatmul.mubr.f32.gmra.mxu0 %v919
        %v1013 = vpop.f32.mrf.mxu0
        %v1014 = vadd.f32 0.0, %v1013
        %v1015 = vpop.f32.mrf.mxu0
        %1016 = vmatprep.mubr.f32.mxu0 0.0
        %1017 = vmatmul.mubr.f32.gmra.mxu0 %v920
        %v1018 = vpop.f32.mrf.mxu0
        %v1019 = vadd.f32 0.0, %v1018
        %v1020 = vpop.f32.mrf.mxu0
        %1021 = vmatprep.mubr.f32.mxu0 0.0
        %1022 = vmatmul.mubr.f32.gmra.mxu0 %v921
        %v1023 = vpop.f32.mrf.mxu0
        %v1024 = vadd.f32 0.0, %v1023
        %v1025 = vpop.f32.mrf.mxu0
        %1026 = vmatprep.mubr.f32.mxu0 0.0
        %1027 = vmatmul.mubr.f32.gmra.mxu0 %v922
        %v1028 = vpop.f32.mrf.mxu0
        %v1029 = vadd.f32 0.0, %v1028
        %v1030 = vpop.f32.mrf.mxu0
        %1031 = vmatprep.mubr.f32.mxu0 0.0
        %1032 = vmatmul.mubr.f32.gmra.mxu0 %v923
        %v1033 = vpop.f32.mrf.mxu0
        %v1034 = vadd.f32 0.0, %v1033
        %v1035 = vpop.f32.mrf.mxu0
        %1036 = vmatprep.mubr.f32.mxu0 0.0
        %1037 = vmatmul.mubr.f32.gmra.mxu0 %v924
        %v1038 = vpop.f32.mrf.mxu0
        %v1039 = vadd.f32 0.0, %v1038
        %v1040 = vpop.f32.mrf.mxu0
        %1041 = vmatprep.mubr.f32.mxu0 0.0
        %1042 = vmatmul.mubr.f32.gmra.mxu0 %v925
        %v1043 = vpop.f32.mrf.mxu0
        %v1044 = vadd.f32 0.0, %v1043
        %v1045 = vpop.f32.mrf.mxu0
        %1046 = vdwg.mxu0
        %vm1047 = vcmask 7168
        %1048 = vst.msk [vmem:[%s292] sm:$0xff] %vm1047, %v1009
        %1049 = vst.msk [vmem:[%s292 + $0x8] sm:$0xff] %vm1047, %v1014
        %1050 = vst.msk [vmem:[%s292 + $0x10] sm:$0xff] %vm1047, %v1019
        %1051 = vst.msk [vmem:[%s292 + $0x18] sm:$0xff] %vm1047, %v1024
        %1052 = vst.msk [vmem:[%s292 + $0x20] sm:$0xff] %vm1047, %v1029
        %1053 = vst.msk [vmem:[%s292 + $0x28] sm:$0xff] %vm1047, %v1034
        %1054 = vst.msk [vmem:[%s292 + $0x30] sm:$0xff] %vm1047, %v1039
        %1055 = vst.msk [vmem:[%s292 + $0x38] sm:$0xff] %vm1047, %v1044
      $region60: #{kuranet_full_forward.2} parent=47 // pred_fallthru
        _
      %s1056 = smul.u32 8, %s23
      %p1057 = scmp.lt.s32.totalorder %s1056, 7
      %s1058 = scalar_select %p1057, %s1056, 7
      %s1059 = smul.addr %s1058, 8
      %s1060 = scalar_lea.vmem %s7, %s1059
      // Predicated region
      $region61: #{kuranet_full_forward.2} parent=47 // pred_check
        %p1061 = pneg %p200
      $region62: #{kuranet_full_forward.2} parent=47 // pred_check_branch
        %1063 = sbr.rel (%p1061) target = $region64
      $region63: #{kuranet_full_forward.2} parent=47 // pred_region
        %s1064 = smul.u32 8, %s23
      $region64: #{kuranet_full_forward.2} parent=47 // pred_fallthru
        _
      // Predicated region
      $region65: #{kuranet_full_forward.2} parent=47 // pred_check
        %p1065 = pneg %p200
      $region66: #{kuranet_full_forward.2} parent=47 // pred_check_branch
        %1067 = sbr.rel (%p1065) target = $region68
      $region67: #{kuranet_full_forward.2} parent=47 // pred_region
        %s1068 = smul.u32 8, %s23
        %p1069 = scmp.lt.s32.totalorder %s1068, 7
        %s1070 = scalar_select %p1069, %s1068, 7
        %s1071 = smul.addr %s1070, 8
        %s1072 = scalar_lea.vmem %s7, %s1071
      $region68: #{kuranet_full_forward.2} parent=47 // pred_fallthru
        _
    $region48: #{kuranet_full_forward.2} parent=5 // pred_fallthru
      _
    %p1073 = scmp.le.s32.totalorder 2, %s13
    // Predicated region
    $region69: #{kuranet_full_forward.2} parent=5 // pred_check
      %p1074 = pneg %p1073
    $region70: #{kuranet_full_forward.2} parent=5 // pred_check_branch
      %1076 = sbr.rel (%p1074) target = $region72
    $region71: #{kuranet_full_forward.2} parent=5 // pred_region
      %s1077 = ssub.s32 %s13, 2
    $region72: #{kuranet_full_forward.2} parent=5 // pred_fallthru
      _
  $region6: #{kuranet_full_forward.2} parent=0 // loop_footer
    %s17 = sadd.s32 1, %s13
  $region7: #{kuranet_full_forward.2} parent=0 // loop_footer_branch
    %12 = sbr.rel target = $region3
  $region8: #{kuranet_full_forward.2} parent=0 // loop_exit
    _

</llo_original>
